<compile_context>
chip_gen: v6e
topology: v6e:2x2x1
jax: 0.10.0
libtpu: 0.0.40
codegen_flags: <defaults>
</compile_context>

<pallas_src>
import functools

import jax
import jax.numpy as jnp
from jax.experimental import pallas as pl
from jax.experimental.pallas import tpu as pltpu

INPUT_DIM = 3
OUTPUT_DIM = 3
HIDDEN_DIMS = [128, 256, 512, 256, 128]
BN_EPS = 1e-5


def _round_up(n, m):
    return ((n + m - 1) // m) * m


def _chip_config():
    """Generation-aware knobs, detected from device_kind (conservative fallback)."""
    kind = ""
    try:
        kind = jax.devices()[0].device_kind.lower()
    except Exception:
        pass
    if "v7" in kind or "7x" in kind:
        # v7x: 64 MiB VMEM, 2 TCs/chip, 256-wide MXU, bf16 VALU/EUP.
        return dict(max_tile=4096, vmem_cap=56 << 20, bf16_epilogue=True,
                    offload_thin=True, even_grid=True)
    if "v6" in kind:
        # v6e: 128 MiB VMEM, 256-wide MXU, bf16 VALU/EUP.
        return dict(max_tile=8192, vmem_cap=100 << 20, bf16_epilogue=True,
                    offload_thin=True, even_grid=False)
    if "v5 lite" in kind or "v5e" in kind or "v5lite" in kind:
        # v5e: 128 MiB VMEM, 128-wide MXU, no bf16 VALU -> f32 epilogue, MXU everywhere.
        return dict(max_tile=8192, vmem_cap=100 << 20, bf16_epilogue=False,
                    offload_thin=False, even_grid=False)
    # Unknown generation: conservative, portable settings.
    return dict(max_tile=2048, vmem_cap=48 << 20, bf16_epilogue=False,
                offload_thin=False, even_grid=False)


def _pick_tile(batch, max_tile, even_grid):
    """Batch tile: multiple of 8 sublanes, derived from the desired grid length
    (avoids padding a whole extra tile); even grid on v7x for megacore balance."""
    b8 = _round_up(max(batch, 1), 8)
    n_steps = -(-b8 // max_tile)                  # ceil div
    if even_grid and b8 > 8:
        n_steps = max(2, n_steps)
        if n_steps % 2:
            n_steps += 1
    tile = _round_up(-(-b8 // n_steps), 8)
    return min(tile, max_tile)


def _vmem_limit_bytes(tile_b, bf16_epilogue, flat_params, cap):
    """Estimate VMEM need from tile_b and cap per generation."""
    param_bytes = 2 * sum(p.size * p.dtype.itemsize for p in flat_params)  # 2x: double-buffered
    io_bytes = 2 * tile_b * 128 * (2 + 4)          # lane-padded (tile,3) blocks: x bf16 + out f32
    act_elem = 2 if bf16_epilogue else 4
    # Widest live set (256->512 layer): input + f32 accumulator + result.
    act_bytes = tile_b * (256 * act_elem + 512 * 4 + 512 * act_elem)
    est = param_bytes + io_bytes + 2 * act_bytes + (8 << 20)   # 2x margin + slack
    return int(max(32 << 20, min(cap, est)))


def _make_mlp_kernel(bf16_epilogue, offload_thin):
    ep = jnp.bfloat16 if bf16_epilogue else jnp.float32

    def kernel(x_ref, w1, b1, w2, b2, w3, b3, w4, b4, w5, b5, w6, b6, out_ref):
        def dense(h, w_ref, b_ref):
            acc = jnp.dot(h.astype(jnp.bfloat16), w_ref[...],
                          preferred_element_type=jnp.float32)
            if bf16_epilogue:
                return acc.astype(ep) + b_ref[...].astype(ep)
            return acc + b_ref[...]

        x = x_ref[...]                                        # (tile_b, 3) bf16

        # ---- layer 1: 3 -> 128 (Linear + folded BN) ----------------------
        if offload_thin:
            # K=3 is ~99% padding on a 256-wide MXU; 3 rank-1 VPU updates instead.
            xf = x.astype(jnp.float32)
            w1v = w1[...].astype(jnp.float32)                 # (3, 128)
            acc = (xf[:, 0:1] * w1v[0:1, :]
                   + xf[:, 1:2] * w1v[1:2, :]
                   + xf[:, 2:3] * w1v[2:3, :])
            if bf16_epilogue:
                h = acc.astype(ep) + b1[...].astype(ep)
            else:
                h = acc + b1[...]
        else:
            h = dense(x, w1, b1)
        h = jnp.maximum(h, 0.0)                               # ReLU; Dropout = identity (eval)

        # ---- layers 2-4: Linear(+BN) -> ReLU ------------------------------
        h = jnp.maximum(dense(h, w2, b2), 0.0)
        h = jnp.maximum(dense(h, w3, b3), 0.0)
        h = jnp.maximum(dense(h, w4, b4), 0.0)

        # ---- layer 5: Linear(+BN) -> Tanh ---------------------------------
        h = jnp.tanh(dense(h, w5, b5))

        # ---- head: 128 -> 3, Tanh -----------------------------------------
        if offload_thin:
            # N=3 head as VPU multiplies + lane reductions (w6 passed as (3, 128)).
            hf = h.astype(jnp.float32)
            w6t = w6[...].astype(jnp.float32)
            cols = [jnp.sum(hf * w6t[j:j + 1, :], axis=-1, keepdims=True)
                    for j in range(OUTPUT_DIM)]
            acc = jnp.concatenate(cols, axis=-1) + b6[...]
        else:
            acc = jnp.dot(h.astype(jnp.bfloat16), w6[...],
                          preferred_element_type=jnp.float32) + b6[...]
        out_ref[...] = jnp.tanh(acc).astype(out_ref.dtype)

    return kernel


def init_params(key):
    """Init mirroring PerceptualMappingNet._initialize_weights (kaiming_normal
    fan_out/relu, zero bias), with eval-mode BatchNorm folded into each hidden
    Linear.  Weight layout is [in_features, out_features]; weights bf16, biases f32."""
    dims = [INPUT_DIM] + HIDDEN_DIMS + [OUTPUT_DIM]
    flat = []
    for li in range(len(dims) - 1):
        d_in, d_out = dims[li], dims[li + 1]
        key, wk = jax.random.split(key)
        std = (2.0 / d_out) ** 0.5                            # fan_out, relu
        w = jax.random.normal(wk, (d_in, d_out), dtype=jnp.float32) * std
        b = jnp.zeros((1, d_out), dtype=jnp.float32)
        if li < len(HIDDEN_DIMS):
            # Fold eval-mode BN (gamma=1, beta=0, running mean=0, var=1).
            gamma = jnp.ones((d_out,), jnp.float32)
            beta = jnp.zeros((d_out,), jnp.float32)
            r_mean = jnp.zeros((d_out,), jnp.float32)
            r_var = jnp.ones((d_out,), jnp.float32)
            scale = gamma / jnp.sqrt(r_var + BN_EPS)
            shift = beta - r_mean * scale
            w = w * scale[None, :]
            b = b * scale[None, :] + shift[None, :]
        flat.append(w.astype(jnp.bfloat16))
        flat.append(b.astype(jnp.float32))
    return flat


@functools.partial(
    jax.jit,
    static_argnames=("tile_b", "bf16_epilogue", "offload_thin", "vmem_limit"))
def _forward_impl(x, flat_params, *, tile_b, bf16_epilogue, offload_thin, vmem_limit):
    B = x.shape[0]
    grid_n = pl.cdiv(max(B, 1), tile_b)
    b_pad = grid_n * tile_b

    x = x.astype(jnp.bfloat16)                       # bf16 at the kernel boundary
    if b_pad != B:
        x = jnp.pad(x, ((0, b_pad - B), (0, 0)))

    params = list(flat_params)
    if offload_thin:
        params[-2] = params[-2].T                    # head weight as (3, 128)

    # Weights/biases are VMEM-resident (constant index_map); x/out tiled over batch.
    param_specs = [pl.BlockSpec(p.shape, lambda i: (0, 0)) for p in params]

    dims = [INPUT_DIM] + HIDDEN_DIMS + [OUTPUT_DIM]
    flops = 2 * b_pad * sum(a * b for a, b in zip(dims[:-1], dims[1:]))
    param_bytes = sum(p.size * p.dtype.itemsize for p in params)
    cost = pl.CostEstimate(
        flops=flops,
        transcendentals=b_pad * (HIDDEN_DIMS[-1] + OUTPUT_DIM),
        bytes_accessed=param_bytes + b_pad * (INPUT_DIM * 2 + OUTPUT_DIM * 4))

    kernel = _make_mlp_kernel(bf16_epilogue, offload_thin)

    out = pl.pallas_call(
        kernel,
        out_shape=jax.ShapeDtypeStruct((b_pad, OUTPUT_DIM), jnp.float32),
        grid=(grid_n,),
        in_specs=[pl.BlockSpec((tile_b, INPUT_DIM), lambda i: (i, 0))] + param_specs,
        out_specs=pl.BlockSpec((tile_b, OUTPUT_DIM), lambda i: (i, 0)),
        compiler_params=pltpu.CompilerParams(
            dimension_semantics=("parallel",),
            vmem_limit_bytes=vmem_limit),
        cost_estimate=cost,
    )(x, *params)
    return out[:B]


def perceptual_mapping_forward(x, flat_params):
    cfg = _chip_config()
    tile_b = _pick_tile(x.shape[0], cfg["max_tile"], cfg["even_grid"])
    vmem_limit = _vmem_limit_bytes(tile_b, cfg["bf16_epilogue"], flat_params,
                                   cfg["vmem_cap"])
    return _forward_impl(x, tuple(flat_params), tile_b=tile_b,
                         bf16_epilogue=cfg["bf16_epilogue"],
                         offload_thin=cfg["offload_thin"],
                         vmem_limit=vmem_limit)


def reference_forward(x, flat_params, bf16_epilogue):
    """Pure-JAX reference using the same numeric recipe as the kernel."""
    ep = jnp.bfloat16 if bf16_epilogue else jnp.float32
    ws, bs = flat_params[0::2], flat_params[1::2]
    n_hidden = len(HIDDEN_DIMS)
    h = x.astype(jnp.bfloat16)
    for i in range(n_hidden):
        acc = jnp.dot(h.astype(jnp.bfloat16), ws[i], preferred_element_type=jnp.float32)
        z = (acc.astype(ep) + bs[i].astype(ep)) if bf16_epilogue else (acc + bs[i])
        h = jnp.maximum(z, 0.0) if i < n_hidden - 1 else jnp.tanh(z)
    acc = jnp.dot(h.astype(jnp.bfloat16), ws[-1],
                  preferred_element_type=jnp.float32) + bs[-1]
    return jnp.tanh(acc).astype(jnp.float32)


if __name__ == "__main__":
    key = jax.random.PRNGKey(0)
    pkey, xkey = jax.random.split(key)

    flat_params = init_params(pkey)

    batch = 16
    x = jax.random.normal(xkey, (batch, INPUT_DIM), dtype=jnp.float32)

    out = jax.block_until_ready(perceptual_mapping_forward(x, flat_params))

    cfg = _chip_config()
    ref = reference_forward(x, flat_params, cfg["bf16_epilogue"])
    assert out.shape == (batch, OUTPUT_DIM)
    # bf16 matmul inputs (and bf16 epilogue on v6e/v7x) -> loose tolerance.
    assert jnp.allclose(out, ref, atol=2e-2, rtol=2e-2), "mismatch vs JAX reference"

    print("KERNEL_OK")
</pallas_src>

<mosaic_0001>
module attributes {stable_mosaic.version = 11 : i64} {
  func.func @kernel(%arg0: i32, %arg1: memref<16x3xbf16, #tpu.memory_space<vmem>>, %arg2: memref<3x128xbf16, #tpu.memory_space<vmem>>, %arg3: memref<1x128xf32, #tpu.memory_space<vmem>>, %arg4: memref<128x256xbf16, #tpu.memory_space<vmem>>, %arg5: memref<1x256xf32, #tpu.memory_space<vmem>>, %arg6: memref<256x512xbf16, #tpu.memory_space<vmem>>, %arg7: memref<1x512xf32, #tpu.memory_space<vmem>>, %arg8: memref<512x256xbf16, #tpu.memory_space<vmem>>, %arg9: memref<1x256xf32, #tpu.memory_space<vmem>>, %arg10: memref<256x128xbf16, #tpu.memory_space<vmem>>, %arg11: memref<1x128xf32, #tpu.memory_space<vmem>>, %arg12: memref<128x3xbf16, #tpu.memory_space<vmem>>, %arg13: memref<1x3xf32, #tpu.memory_space<vmem>>, %arg14: memref<16x3xf32, #tpu.memory_space<vmem>>) attributes {dimension_semantics = [#tpu.dimension_semantics<parallel>], iteration_bounds = array<i64: 1>, scalar_prefetch = 0 : i64, scratch_operands = 0 : i64, tpu.core_type = #tpu.core_type<tc>, window_params = [{transform_indices = @transform_0, window_bounds = array<i64: 16, 3>}, {pipeline_mode = #tpu.pipeline_mode<synchronous>, transform_indices = @transform_1, window_bounds = array<i64: 3, 128>}, {pipeline_mode = #tpu.pipeline_mode<synchronous>, transform_indices = @transform_2, window_bounds = array<i64: 1, 128>}, {pipeline_mode = #tpu.pipeline_mode<synchronous>, transform_indices = @transform_3, window_bounds = array<i64: 128, 256>}, {pipeline_mode = #tpu.pipeline_mode<synchronous>, transform_indices = @transform_4, window_bounds = array<i64: 1, 256>}, {pipeline_mode = #tpu.pipeline_mode<synchronous>, transform_indices = @transform_5, window_bounds = array<i64: 256, 512>}, {pipeline_mode = #tpu.pipeline_mode<synchronous>, transform_indices = @transform_6, window_bounds = array<i64: 1, 512>}, {pipeline_mode = #tpu.pipeline_mode<synchronous>, transform_indices = @transform_7, window_bounds = array<i64: 512, 256>}, {pipeline_mode = #tpu.pipeline_mode<synchronous>, transform_indices = @transform_8, window_bounds = array<i64: 1, 256>}, {pipeline_mode = #tpu.pipeline_mode<synchronous>, transform_indices = @transform_9, window_bounds = array<i64: 256, 128>}, {pipeline_mode = #tpu.pipeline_mode<synchronous>, transform_indices = @transform_10, window_bounds = array<i64: 1, 128>}, {pipeline_mode = #tpu.pipeline_mode<synchronous>, transform_indices = @transform_11, window_bounds = array<i64: 128, 3>}, {pipeline_mode = #tpu.pipeline_mode<synchronous>, transform_indices = @transform_12, window_bounds = array<i64: 1, 3>}, {transform_indices = @transform_13, window_bounds = array<i64: 16, 3>}]} {
    %c0 = arith.constant 0 : index
    %c0_0 = arith.constant 0 : index
    %0 = vector.load %arg1[%c0, %c0_0] : memref<16x3xbf16, #tpu.memory_space<vmem>>, vector<16x3xbf16>
    %c0_1 = arith.constant 0 : index
    %c0_2 = arith.constant 0 : index
    %1 = vector.load %arg2[%c0_1, %c0_2] : memref<3x128xbf16, #tpu.memory_space<vmem>>, vector<3x128xbf16>
    %cst = arith.constant dense<0.000000e+00> : vector<16x128xf32>
    %2 = tpu.matmul %0, %1, %cst {dimension_numbers = #tpu.dot_dimension_numbers<[1], [0], [0], [1], [0, 0, 1, 1], [], []>} : vector<16x3xbf16>, vector<3x128xbf16>, vector<16x128xf32> -> vector<16x128xf32>
    %c0_3 = arith.constant 0 : index
    %c0_4 = arith.constant 0 : index
    %3 = vector.load %arg3[%c0_3, %c0_4] : memref<1x128xf32, #tpu.memory_space<vmem>>, vector<1x128xf32>
    %4 = vector.broadcast %3 : vector<1x128xf32> to vector<16x128xf32>
    %5 = arith.addf %2, %4 : vector<16x128xf32>
    %cst_5 = arith.constant 0.000000e+00 : f32
    %6 = vector.broadcast %cst_5 : f32 to vector<16x128xf32>
    %7 = arith.maximumf %5, %6 : vector<16x128xf32>
    %8 = arith.truncf %7 : vector<16x128xf32> to vector<16x128xbf16>
    %c0_6 = arith.constant 0 : index
    %c0_7 = arith.constant 0 : index
    %9 = vector.load %arg4[%c0_6, %c0_7] : memref<128x256xbf16, #tpu.memory_space<vmem>>, vector<128x256xbf16>
    %cst_8 = arith.constant dense<0.000000e+00> : vector<16x256xf32>
    %10 = tpu.matmul %8, %9, %cst_8 {dimension_numbers = #tpu.dot_dimension_numbers<[1], [0], [0], [1], [0, 0, 1, 1], [], []>} : vector<16x128xbf16>, vector<128x256xbf16>, vector<16x256xf32> -> vector<16x256xf32>
    %c0_9 = arith.constant 0 : index
    %c0_10 = arith.constant 0 : index
    %11 = vector.load %arg5[%c0_9, %c0_10] : memref<1x256xf32, #tpu.memory_space<vmem>>, vector<1x256xf32>
    %12 = vector.broadcast %11 : vector<1x256xf32> to vector<16x256xf32>
    %13 = arith.addf %10, %12 : vector<16x256xf32>
    %cst_11 = arith.constant 0.000000e+00 : f32
    %14 = vector.broadcast %cst_11 : f32 to vector<16x256xf32>
    %15 = arith.maximumf %13, %14 : vector<16x256xf32>
    %16 = arith.truncf %15 : vector<16x256xf32> to vector<16x256xbf16>
    %c0_12 = arith.constant 0 : index
    %c0_13 = arith.constant 0 : index
    %17 = vector.load %arg6[%c0_12, %c0_13] : memref<256x512xbf16, #tpu.memory_space<vmem>>, vector<256x512xbf16>
    %cst_14 = arith.constant dense<0.000000e+00> : vector<16x512xf32>
    %18 = tpu.matmul %16, %17, %cst_14 {dimension_numbers = #tpu.dot_dimension_numbers<[1], [0], [0], [1], [0, 0, 1, 1], [], []>} : vector<16x256xbf16>, vector<256x512xbf16>, vector<16x512xf32> -> vector<16x512xf32>
    %c0_15 = arith.constant 0 : index
    %c0_16 = arith.constant 0 : index
    %19 = vector.load %arg7[%c0_15, %c0_16] : memref<1x512xf32, #tpu.memory_space<vmem>>, vector<1x512xf32>
    %20 = vector.broadcast %19 : vector<1x512xf32> to vector<16x512xf32>
    %21 = arith.addf %18, %20 : vector<16x512xf32>
    %cst_17 = arith.constant 0.000000e+00 : f32
    %22 = vector.broadcast %cst_17 : f32 to vector<16x512xf32>
    %23 = arith.maximumf %21, %22 : vector<16x512xf32>
    %24 = arith.truncf %23 : vector<16x512xf32> to vector<16x512xbf16>
    %c0_18 = arith.constant 0 : index
    %c0_19 = arith.constant 0 : index
    %25 = vector.load %arg8[%c0_18, %c0_19] : memref<512x256xbf16, #tpu.memory_space<vmem>>, vector<512x256xbf16>
    %cst_20 = arith.constant dense<0.000000e+00> : vector<16x256xf32>
    %26 = tpu.matmul %24, %25, %cst_20 {dimension_numbers = #tpu.dot_dimension_numbers<[1], [0], [0], [1], [0, 0, 1, 1], [], []>} : vector<16x512xbf16>, vector<512x256xbf16>, vector<16x256xf32> -> vector<16x256xf32>
    %c0_21 = arith.constant 0 : index
    %c0_22 = arith.constant 0 : index
    %27 = vector.load %arg9[%c0_21, %c0_22] : memref<1x256xf32, #tpu.memory_space<vmem>>, vector<1x256xf32>
    %28 = vector.broadcast %27 : vector<1x256xf32> to vector<16x256xf32>
    %29 = arith.addf %26, %28 : vector<16x256xf32>
    %cst_23 = arith.constant 0.000000e+00 : f32
    %30 = vector.broadcast %cst_23 : f32 to vector<16x256xf32>
    %31 = arith.maximumf %29, %30 : vector<16x256xf32>
    %32 = arith.truncf %31 : vector<16x256xf32> to vector<16x256xbf16>
    %c0_24 = arith.constant 0 : index
    %c0_25 = arith.constant 0 : index
    %33 = vector.load %arg10[%c0_24, %c0_25] : memref<256x128xbf16, #tpu.memory_space<vmem>>, vector<256x128xbf16>
    %cst_26 = arith.constant dense<0.000000e+00> : vector<16x128xf32>
    %34 = tpu.matmul %32, %33, %cst_26 {dimension_numbers = #tpu.dot_dimension_numbers<[1], [0], [0], [1], [0, 0, 1, 1], [], []>} : vector<16x256xbf16>, vector<256x128xbf16>, vector<16x128xf32> -> vector<16x128xf32>
    %c0_27 = arith.constant 0 : index
    %c0_28 = arith.constant 0 : index
    %35 = vector.load %arg11[%c0_27, %c0_28] : memref<1x128xf32, #tpu.memory_space<vmem>>, vector<1x128xf32>
    %36 = vector.broadcast %35 : vector<1x128xf32> to vector<16x128xf32>
    %37 = arith.addf %34, %36 : vector<16x128xf32>
    %38 = math.tanh %37 : vector<16x128xf32>
    %39 = arith.truncf %38 : vector<16x128xf32> to vector<16x128xbf16>
    %c0_29 = arith.constant 0 : index
    %c0_30 = arith.constant 0 : index
    %40 = vector.load %arg12[%c0_29, %c0_30] : memref<128x3xbf16, #tpu.memory_space<vmem>>, vector<128x3xbf16>
    %cst_31 = arith.constant dense<0.000000e+00> : vector<16x3xf32>
    %41 = tpu.matmul %39, %40, %cst_31 {dimension_numbers = #tpu.dot_dimension_numbers<[1], [0], [0], [1], [0, 0, 1, 1], [], []>} : vector<16x128xbf16>, vector<128x3xbf16>, vector<16x3xf32> -> vector<16x3xf32>
    %c0_32 = arith.constant 0 : index
    %c0_33 = arith.constant 0 : index
    %42 = vector.load %arg13[%c0_32, %c0_33] : memref<1x3xf32, #tpu.memory_space<vmem>>, vector<1x3xf32>
    %43 = vector.broadcast %42 : vector<1x3xf32> to vector<16x3xf32>
    %44 = arith.addf %41, %43 : vector<16x3xf32>
    %45 = math.tanh %44 : vector<16x3xf32>
    %c0_34 = arith.constant 0 : index
    %c0_35 = arith.constant 0 : index
    %46 = vector.load %arg14[%c0_34, %c0_35] : memref<16x3xf32, #tpu.memory_space<vmem>>, vector<16x3xf32>
    tpu.vector_store %arg14[%c0_34, %c0_35], %45 {strides = array<i32>} : memref<16x3xf32, #tpu.memory_space<vmem>>, vector<16x3xf32>,
    return
  }
  func.func @transform_0(%arg0: i32) -> (i32, i32) {
    %c0_i32 = arith.constant 0 : i32
    %c0_i32_0 = arith.constant 0 : i32
    return %arg0, %c0_i32 : i32, i32
  }
  func.func @transform_1(%arg0: i32) -> (i32, i32) {
    %c0_i32 = arith.constant 0 : i32
    %c0_i32_0 = arith.constant 0 : i32
    %c0_i32_1 = arith.constant 0 : i32
    return %c0_i32, %c0_i32_0 : i32, i32
  }
  func.func @transform_2(%arg0: i32) -> (i32, i32) {
    %c0_i32 = arith.constant 0 : i32
    %c0_i32_0 = arith.constant 0 : i32
    %c0_i32_1 = arith.constant 0 : i32
    return %c0_i32, %c0_i32_0 : i32, i32
  }
  func.func @transform_3(%arg0: i32) -> (i32, i32) {
    %c0_i32 = arith.constant 0 : i32
    %c0_i32_0 = arith.constant 0 : i32
    %c0_i32_1 = arith.constant 0 : i32
    return %c0_i32, %c0_i32_0 : i32, i32
  }
  func.func @transform_4(%arg0: i32) -> (i32, i32) {
    %c0_i32 = arith.constant 0 : i32
    %c0_i32_0 = arith.constant 0 : i32
    %c0_i32_1 = arith.constant 0 : i32
    return %c0_i32, %c0_i32_0 : i32, i32
  }
  func.func @transform_5(%arg0: i32) -> (i32, i32) {
    %c0_i32 = arith.constant 0 : i32
    %c0_i32_0 = arith.constant 0 : i32
    %c0_i32_1 = arith.constant 0 : i32
    return %c0_i32, %c0_i32_0 : i32, i32
  }
  func.func @transform_6(%arg0: i32) -> (i32, i32) {
    %c0_i32 = arith.constant 0 : i32
    %c0_i32_0 = arith.constant 0 : i32
    %c0_i32_1 = arith.constant 0 : i32
    return %c0_i32, %c0_i32_0 : i32, i32
  }
  func.func @transform_7(%arg0: i32) -> (i32, i32) {
    %c0_i32 = arith.constant 0 : i32
    %c0_i32_0 = arith.constant 0 : i32
    %c0_i32_1 = arith.constant 0 : i32
    return %c0_i32, %c0_i32_0 : i32, i32
  }
  func.func @transform_8(%arg0: i32) -> (i32, i32) {
    %c0_i32 = arith.constant 0 : i32
    %c0_i32_0 = arith.constant 0 : i32
    %c0_i32_1 = arith.constant 0 : i32
    return %c0_i32, %c0_i32_0 : i32, i32
  }
  func.func @transform_9(%arg0: i32) -> (i32, i32) {
    %c0_i32 = arith.constant 0 : i32
    %c0_i32_0 = arith.constant 0 : i32
    %c0_i32_1 = arith.constant 0 : i32
    return %c0_i32, %c0_i32_0 : i32, i32
  }
  func.func @transform_10(%arg0: i32) -> (i32, i32) {
    %c0_i32 = arith.constant 0 : i32
    %c0_i32_0 = arith.constant 0 : i32
    %c0_i32_1 = arith.constant 0 : i32
    return %c0_i32, %c0_i32_0 : i32, i32
  }
  func.func @transform_11(%arg0: i32) -> (i32, i32) {
    %c0_i32 = arith.constant 0 : i32
    %c0_i32_0 = arith.constant 0 : i32
    %c0_i32_1 = arith.constant 0 : i32
    return %c0_i32, %c0_i32_0 : i32, i32
  }
  func.func @transform_12(%arg0: i32) -> (i32, i32) {
    %c0_i32 = arith.constant 0 : i32
    %c0_i32_0 = arith.constant 0 : i32
    %c0_i32_1 = arith.constant 0 : i32
    return %c0_i32, %c0_i32_0 : i32, i32
  }
  func.func @transform_13(%arg0: i32) -> (i32, i32) {
    %c0_i32 = arith.constant 0 : i32
    %c0_i32_0 = arith.constant 0 : i32
    return %arg0, %c0_i32 : i32, i32
  }
}

</mosaic_0001>

<llo_original>
// kernel: _forward_impl.1
$region0: #{_forward_impl.1}
  #allocation0 [shape = 'u32[]', space=smem, size = 0x4, offset = 0x4, fixed_abs, tag = 'smem constant byte address 0x4 - core index']
  #allocation1 [shape = 'u32[144,128]{1,0:T(1,128)}', space=vmem, size = 0x12000, scoped, tag = 'internal scratch']
  %s0 = inlined_call_operand.vmem [shape: bf16[16,3], index: 0, kind: input, shape index: {}]
  %s1 = inlined_call_operand.vmem [shape: bf16[3,128], index: 1, kind: input, shape index: {}]
  %s2 = inlined_call_operand.vmem [shape: f32[1,128], index: 2, kind: input, shape index: {}]
  %s3 = inlined_call_operand.hbm [shape: bf16[128,256], index: 3, kind: input, shape index: {}]
  %s4 = inlined_call_operand.vmem [shape: f32[1,256], index: 4, kind: input, shape index: {}]
  %s5 = inlined_call_operand.hbm [shape: bf16[256,512], index: 5, kind: input, shape index: {}]
  %s6 = inlined_call_operand.vmem [shape: f32[1,512], index: 6, kind: input, shape index: {}]
  %s7 = inlined_call_operand.hbm [shape: bf16[512,256], index: 7, kind: input, shape index: {}]
  %s8 = inlined_call_operand.vmem [shape: f32[1,256], index: 8, kind: input, shape index: {}]
  %s9 = inlined_call_operand.hbm [shape: bf16[256,128], index: 9, kind: input, shape index: {}]
  %s10 = inlined_call_operand.vmem [shape: f32[1,128], index: 10, kind: input, shape index: {}]
  %s11 = inlined_call_operand.vmem [shape: bf16[128,3], index: 11, kind: input, shape index: {}]
  %s12 = inlined_call_operand.vmem [shape: f32[1,3], index: 12, kind: input, shape index: {}]
  %s13 = inlined_call_operand.vmem [shape: f32[16,3], index: 13, kind: output, shape index: {}]
  %s14 = sld [smem:[#allocation0]]
  $region78: #{_forward_impl.1} parent=0
    _
  %s16 = ssub.s32 1, %s14
  %s17 = scalar_select 0, %s16, %s14
  $region1: #{_forward_impl.1} parent=0
    #allocation2 [shape = 'u8[65536]{0}', space=vmem, size = 0x10000, scoped, tag = 'input window, operand 3, single buffered']
    #allocation3 [shape = 's32[1]{0}', space=sflag, size = 0x4, scoped, tag = 'scoped memory for _forward_impl.1']
    #allocation4 [shape = 'u8[262144]{0}', space=vmem, size = 0x40000, scoped, tag = 'input window, operand 5, single buffered']
    #allocation5 [shape = 's32[1]{0}', space=sflag, size = 0x4, scoped, tag = 'scoped memory for _forward_impl.1']
    #allocation6 [shape = 'u8[262144]{0}', space=vmem, size = 0x40000, scoped, tag = 'input window, operand 7, single buffered']
    #allocation7 [shape = 'u8[65536]{0}', space=vmem, size = 0x10000, scoped, tag = 'input window, operand 9, single buffered']
    #allocation8 [shape = 's32[1]{0}', space=sflag, size = 0x4, scoped, tag = 'scoped memory for _forward_impl.1']
    %18 = vsyncpa [#allocation3], 0
    %19 = vsyncpa [#allocation5], 0
    %20 = vsyncpa [#allocation8], 0
    // Predicated region
    $region2: #{_forward_impl.1} parent=1 // pred_check
      _
    $region3: #{_forward_impl.1} parent=1 // pred_check_branch
      %22 = sbr.rel (0) target = $region5
    $region4: #{_forward_impl.1} parent=1 // pred_region
      _
    $region5: #{_forward_impl.1} parent=1 // pred_fallthru
      _
    // Predicated region
    $region6: #{_forward_impl.1} parent=1 // pred_check
      _
    $region7: #{_forward_impl.1} parent=1 // pred_check_branch
      %24 = sbr.rel (0) target = $region9
    $region8: #{_forward_impl.1} parent=1 // pred_region
      _
    $region9: #{_forward_impl.1} parent=1 // pred_fallthru
      _
    // Predicated region
    $region10: #{_forward_impl.1} parent=1 // pred_check
      _
    $region11: #{_forward_impl.1} parent=1 // pred_check_branch
      %26 = sbr.rel (0) target = $region13
    $region12: #{_forward_impl.1} parent=1 // pred_region
      _
    $region13: #{_forward_impl.1} parent=1 // pred_fallthru
      _
    // Predicated region
    $region14: #{_forward_impl.1} parent=1 // pred_check
      _
    $region15: #{_forward_impl.1} parent=1 // pred_check_branch
      %28 = sbr.rel (0) target = $region17
    $region16: #{_forward_impl.1} parent=1 // pred_region
      %s30 = ssub.s32 2048, 2048
      %31 = vsyncadd [#allocation3], %s30
      %s32 = sshll.u32 [#allocation2], 4
      %s33 = int_to_ptr.vmem [resolvable:$true] %s32
      %38 = dma.hbm_to_vmem [thread:$0]  %s3, 2048, %s33, [#allocation3], 128, 128, 8
    $region17: #{_forward_impl.1} parent=1 // pred_fallthru
      _
    // Predicated region
    $region18: #{_forward_impl.1} parent=1 // pred_check
      _
    $region19: #{_forward_impl.1} parent=1 // pred_check_branch
      %40 = sbr.rel (0) target = $region21
    $region20: #{_forward_impl.1} parent=1 // pred_region
      _
    $region21: #{_forward_impl.1} parent=1 // pred_fallthru
      _
    // Predicated region
    $region22: #{_forward_impl.1} parent=1 // pred_check
      _
    $region23: #{_forward_impl.1} parent=1 // pred_check_branch
      %42 = sbr.rel (0) target = $region25
    $region24: #{_forward_impl.1} parent=1 // pred_region
      %s44 = ssub.s32 8192, 8192
      %45 = vsyncadd [#allocation5], %s44
      %s46 = sshll.u32 [#allocation4], 4
      %s47 = int_to_ptr.vmem [resolvable:$true] %s46
      %52 = dma.hbm_to_vmem [thread:$0]  %s5, 8192, %s47, [#allocation5], 256, 256, 16
    $region25: #{_forward_impl.1} parent=1 // pred_fallthru
      _
    // Predicated region
    $region26: #{_forward_impl.1} parent=1 // pred_check
      _
    $region27: #{_forward_impl.1} parent=1 // pred_check_branch
      %54 = sbr.rel (0) target = $region29
    $region28: #{_forward_impl.1} parent=1 // pred_region
      _
    $region29: #{_forward_impl.1} parent=1 // pred_fallthru
      _
    // Predicated region
    $region30: #{_forward_impl.1} parent=1 // pred_check
      _
    $region31: #{_forward_impl.1} parent=1 // pred_check_branch
      %56 = sbr.rel (0) target = $region33
    $region32: #{_forward_impl.1} parent=1 // pred_region
      %s58 = ssub.s32 8192, 8192
      %59 = vsyncadd [#allocation5], %s58
      %s60 = sshll.u32 [#allocation6], 4
      %s61 = int_to_ptr.vmem [resolvable:$true] %s60
      %66 = dma.hbm_to_vmem [thread:$0]  %s7, 8192, %s61, [#allocation5], 128, 128, 8
    $region33: #{_forward_impl.1} parent=1 // pred_fallthru
      _
    // Predicated region
    $region34: #{_forward_impl.1} parent=1 // pred_check
      _
    $region35: #{_forward_impl.1} parent=1 // pred_check_branch
      %68 = sbr.rel (0) target = $region37
    $region36: #{_forward_impl.1} parent=1 // pred_region
      _
    $region37: #{_forward_impl.1} parent=1 // pred_fallthru
      _
    // Predicated region
    $region38: #{_forward_impl.1} parent=1 // pred_check
      _
    $region39: #{_forward_impl.1} parent=1 // pred_check_branch
      %70 = sbr.rel (0) target = $region41
    $region40: #{_forward_impl.1} parent=1 // pred_region
      %s72 = ssub.s32 2048, 2048
      %73 = vsyncadd [#allocation8], %s72
      %s74 = sshll.u32 [#allocation7], 4
      %s75 = int_to_ptr.vmem [resolvable:$true] %s74
      %80 = dma.hbm_to_vmem [thread:$0]  %s9, 2048, %s75, [#allocation8], 64, 64, 4
    $region41: #{_forward_impl.1} parent=1 // pred_fallthru
      _
    // Predicated region
    $region42: #{_forward_impl.1} parent=1 // pred_check
      _
    $region43: #{_forward_impl.1} parent=1 // pred_check_branch
      %82 = sbr.rel (0) target = $region45
    $region44: #{_forward_impl.1} parent=1 // pred_region
      _
    $region45: #{_forward_impl.1} parent=1 // pred_fallthru
      _
    // Predicated region
    $region46: #{_forward_impl.1} parent=1 // pred_check
      _
    $region47: #{_forward_impl.1} parent=1 // pred_check_branch
      %84 = sbr.rel (0) target = $region49
    $region48: #{_forward_impl.1} parent=1 // pred_region
      _
    $region49: #{_forward_impl.1} parent=1 // pred_fallthru
      _
    // Predicated region
    $region50: #{_forward_impl.1} parent=1 // pred_check
      _
    $region51: #{_forward_impl.1} parent=1 // pred_check_branch
      %86 = sbr.rel (0) target = $region53
    $region52: #{_forward_impl.1} parent=1 // pred_region
      _
    $region53: #{_forward_impl.1} parent=1 // pred_fallthru
      _
    // Predicated region
    $region54: #{_forward_impl.1} parent=1 // pred_check
      _
    $region55: #{_forward_impl.1} parent=1 // pred_check_branch
      %88 = sbr.rel (0) target = $region57
    $region56: #{_forward_impl.1} parent=1 // pred_region
      %89 = dma.done [#allocation3], 2048
    $region57: #{_forward_impl.1} parent=1 // pred_fallthru
      _
    // Predicated region
    $region58: #{_forward_impl.1} parent=1 // pred_check
      _
    $region59: #{_forward_impl.1} parent=1 // pred_check_branch
      %91 = sbr.rel (0) target = $region61
    $region60: #{_forward_impl.1} parent=1 // pred_region
      %92 = dma.done [#allocation5], 8192
    $region61: #{_forward_impl.1} parent=1 // pred_fallthru
      _
    // Predicated region
    $region62: #{_forward_impl.1} parent=1 // pred_check
      _
    $region63: #{_forward_impl.1} parent=1 // pred_check_branch
      %94 = sbr.rel (0) target = $region65
    $region64: #{_forward_impl.1} parent=1 // pred_region
      %95 = dma.done [#allocation5], 8192
    $region65: #{_forward_impl.1} parent=1 // pred_fallthru
      _
    // Predicated region
    $region66: #{_forward_impl.1} parent=1 // pred_check
      _
    $region67: #{_forward_impl.1} parent=1 // pred_check_branch
      %97 = sbr.rel (0) target = $region69
    $region68: #{_forward_impl.1} parent=1 // pred_region
      %98 = dma.done [#allocation8], 2048
    $region69: #{_forward_impl.1} parent=1 // pred_fallthru
      _
    %v100 = vld [vmem:[%s0] sm:$0xf]
    %v101 = vld [vmem:[%s0 + $0x4] sm:$0xf]
    %v102 = vld [vmem:[%s1] sm:$0x3]
    %v103 = vld [vmem:[%s2] sm:$0x1]
    %v105 = vlaneseq
    %v106 = vshrl.u32 %v105, 7
    %v107 = vsub.s32 0, %v106
    %v108 = vrot.slane %v103, %v107
    %v112 = vunpack.c.l.b16 %v100
    %v113 = vunpack.c.l.b16 %v101
    %v114 = vpack.c.b16 %v113, %v112
    %vm115 = vcmask 23552
    %v117 = vsel %vm115, %v114, 0
    %vm119 = vcmask 1040384
    %vm120 = vcmask 1041408
    %v121 = vsel %vm119, 4294967295, 65535
    %v122 = vsel %vm120, %v121, 0
    %v124 = vand.u32 %v102, %v122
    %126 = vmatprep.subr.bf16.mxu0 0
    %127 = vmatpush1.bf16.msra.mxu0 0
    %128 = vmatprep.subr.bf16.mxu0 0
    %129 = vmatpush1.bf16.msra.mxu0 0
    %130 = vmatprep.subr.bf16.mxu0 0
    %131 = vmatpush1.bf16.msra.mxu0 0
    %132 = vmatprep.subr.bf16.mxu0 0
    %133 = vmatpush1.bf16.msra.mxu0 0
    %134 = vmatprep.subr.bf16.mxu0 0
    %135 = vmatpush1.bf16.msra.mxu0 0
    %136 = vmatprep.subr.bf16.mxu0 0
    %137 = vmatpush1.bf16.msra.mxu0 0
    %138 = vmatprep.subr.bf16.mxu0 0
    %139 = vmatpush1.bf16.msra.mxu0 0
    %140 = vmatprep.subr.bf16.mxu0 0
    %141 = vmatpush1.bf16.msra.mxu0 %v124
    %142 = vmatprep.subr.bf16.mxu0 0
    %143 = vmatpush2.bf16.msra.mxu0 0
    %144 = vmatprep.subr.bf16.mxu0 0
    %145 = vmatpush2.bf16.msra.mxu0 0
    %146 = vmatprep.subr.bf16.mxu0 0
    %147 = vmatpush2.bf16.msra.mxu0 0
    %148 = vmatprep.subr.bf16.mxu0 0
    %149 = vmatpush2.bf16.msra.mxu0 0
    %150 = vmatprep.subr.bf16.mxu0 0
    %151 = vmatpush2.bf16.msra.mxu0 0
    %152 = vmatprep.subr.bf16.mxu0 0
    %153 = vmatpush2.bf16.msra.mxu0 0
    %154 = vmatprep.subr.bf16.mxu0 0
    %155 = vmatpush2.bf16.msra.mxu0 0
    %156 = vmatprep.subr.bf16.mxu0 0
    %157 = vmatpush2.bf16.msra.mxu0 0
    %158 = vmatprep.mubr.bf16.mxu0 0
    %159 = vmatmul.mubr.bf16.gmra.mxu0 %v117
    %v160 = vpop.f32.mrf.mxu0
    %v161 = vadd.f32 %v108, %v160
    %v162 = vpop.f32.mrf.mxu0
    %v163 = vpop.f32.mrf.mxu0
    %v164 = vadd.f32 %v108, %v163
    %v165 = vpop.f32.mrf.mxu0
    %166 = vdwg.mxu0
    %v167 = vmax.f32 %v161, 0.0
    %v168 = vmax.f32 %v164, 0.0
    %v169 = vpack.c.bf16 %v168, %v167
    %v170 = vld [vmem:[#allocation2] sm:$0xff]
    %v171 = vld [vmem:[#allocation2 + $0x8] sm:$0xff]
    %v172 = vld [vmem:[#allocation2 + $0x10] sm:$0xff]
    %v173 = vld [vmem:[#allocation2 + $0x18] sm:$0xff]
    %v174 = vld [vmem:[#allocation2 + $0x20] sm:$0xff]
    %v175 = vld [vmem:[#allocation2 + $0x28] sm:$0xff]
    %v176 = vld [vmem:[#allocation2 + $0x30] sm:$0xff]
    %v177 = vld [vmem:[#allocation2 + $0x38] sm:$0xff]
    %v178 = vld [vmem:[#allocation2 + $0x40] sm:$0xff]
    %v179 = vld [vmem:[#allocation2 + $0x48] sm:$0xff]
    %v180 = vld [vmem:[#allocation2 + $0x50] sm:$0xff]
    %v181 = vld [vmem:[#allocation2 + $0x58] sm:$0xff]
    %v182 = vld [vmem:[#allocation2 + $0x60] sm:$0xff]
    %v183 = vld [vmem:[#allocation2 + $0x68] sm:$0xff]
    %v184 = vld [vmem:[#allocation2 + $0x70] sm:$0xff]
    %v185 = vld [vmem:[#allocation2 + $0x78] sm:$0xff]
    %v186 = vld [vmem:[%s4] sm:$0x3]
    %v188 = vlaneseq
    %v189 = vshrl.u32 %v188, 7
    %v190 = vsub.s32 0, %v189
    %v191 = vrot.slane %v186, %v190
    %v192 = vlaneseq
    %v193 = vshrl.u32 %v192, 7
    %v194 = vsub.s32 1, %v193
    %v195 = vrot.slane %v186, %v194
    %v214 = vunpack.c.l.b16 %v170
    %v215 = vunpack.c.h.b16 %v170
    %v216 = vunpack.c.l.b16 %v171
    %v217 = vunpack.c.h.b16 %v171
    %v218 = vunpack.c.l.b16 %v172
    %v219 = vunpack.c.h.b16 %v172
    %v220 = vunpack.c.l.b16 %v173
    %v221 = vunpack.c.h.b16 %v173
    %v222 = vunpack.c.l.b16 %v174
    %v223 = vunpack.c.h.b16 %v174
    %v224 = vunpack.c.l.b16 %v175
    %v225 = vunpack.c.h.b16 %v175
    %v226 = vunpack.c.l.b16 %v176
    %v227 = vunpack.c.h.b16 %v176
    %v228 = vunpack.c.l.b16 %v177
    %v229 = vunpack.c.h.b16 %v177
    %v230 = vunpack.c.l.b16 %v178
    %v231 = vunpack.c.h.b16 %v178
    %v232 = vunpack.c.l.b16 %v179
    %v233 = vunpack.c.h.b16 %v179
    %v234 = vunpack.c.l.b16 %v180
    %v235 = vunpack.c.h.b16 %v180
    %v236 = vunpack.c.l.b16 %v181
    %v237 = vunpack.c.h.b16 %v181
    %v238 = vunpack.c.l.b16 %v182
    %v239 = vunpack.c.h.b16 %v182
    %v240 = vunpack.c.l.b16 %v183
    %v241 = vunpack.c.h.b16 %v183
    %v242 = vunpack.c.l.b16 %v184
    %v243 = vunpack.c.h.b16 %v184
    %v244 = vunpack.c.l.b16 %v185
    %v245 = vunpack.c.h.b16 %v185
    %v246 = vpack.c.b16 %v216, %v214
    %v247 = vpack.c.b16 %v217, %v215
    %v248 = vpack.c.b16 %v220, %v218
    %v249 = vpack.c.b16 %v221, %v219
    %v250 = vpack.c.b16 %v224, %v222
    %v251 = vpack.c.b16 %v225, %v223
    %v252 = vpack.c.b16 %v228, %v226
    %v253 = vpack.c.b16 %v229, %v227
    %v254 = vpack.c.b16 %v232, %v230
    %v255 = vpack.c.b16 %v233, %v231
    %v256 = vpack.c.b16 %v236, %v234
    %v257 = vpack.c.b16 %v237, %v235
    %v258 = vpack.c.b16 %v240, %v238
    %v259 = vpack.c.b16 %v241, %v239
    %v260 = vpack.c.b16 %v244, %v242
    %v261 = vpack.c.b16 %v245, %v243
    %278 = vmatprep.subr.bf16.mxu0 %v261
    %279 = vmatpush1.bf16.msra.mxu0 %v260
    %280 = vmatprep.subr.bf16.mxu0 %v259
    %281 = vmatpush1.bf16.msra.mxu0 %v258
    %282 = vmatprep.subr.bf16.mxu0 %v257
    %283 = vmatpush1.bf16.msra.mxu0 %v256
    %284 = vmatprep.subr.bf16.mxu0 %v255
    %285 = vmatpush1.bf16.msra.mxu0 %v254
    %286 = vmatprep.subr.bf16.mxu0 %v253
    %287 = vmatpush1.bf16.msra.mxu0 %v252
    %288 = vmatprep.subr.bf16.mxu0 %v251
    %289 = vmatpush1.bf16.msra.mxu0 %v250
    %290 = vmatprep.subr.bf16.mxu0 %v249
    %291 = vmatpush1.bf16.msra.mxu0 %v248
    %292 = vmatprep.subr.bf16.mxu0 %v247
    %293 = vmatpush1.bf16.msra.mxu0 %v246
    %294 = vmatprep.subr.bf16.mxu0 0
    %295 = vmatpush2.bf16.msra.mxu0 0
    %296 = vmatprep.subr.bf16.mxu0 0
    %297 = vmatpush2.bf16.msra.mxu0 0
    %298 = vmatprep.subr.bf16.mxu0 0
    %299 = vmatpush2.bf16.msra.mxu0 0
    %300 = vmatprep.subr.bf16.mxu0 0
    %301 = vmatpush2.bf16.msra.mxu0 0
    %302 = vmatprep.subr.bf16.mxu0 0
    %303 = vmatpush2.bf16.msra.mxu0 0
    %304 = vmatprep.subr.bf16.mxu0 0
    %305 = vmatpush2.bf16.msra.mxu0 0
    %306 = vmatprep.subr.bf16.mxu0 0
    %307 = vmatpush2.bf16.msra.mxu0 0
    %308 = vmatprep.subr.bf16.mxu0 0
    %309 = vmatpush2.bf16.msra.mxu0 0
    %310 = vmatprep.mubr.bf16.mxu0 0
    %311 = vmatmul.mubr.bf16.gmra.mxu0 %v169
    %v312 = vpop.f32.mrf.mxu0
    %v313 = vadd.f32 %v191, %v312
    %v314 = vpop.f32.mrf.mxu0
    %v315 = vadd.f32 %v195, %v314
    %v316 = vpop.f32.mrf.mxu0
    %v317 = vadd.f32 %v191, %v316
    %v318 = vpop.f32.mrf.mxu0
    %v319 = vadd.f32 %v195, %v318
    %320 = vdwg.mxu0
    %v321 = vmax.f32 %v313, 0.0
    %v322 = vmax.f32 %v315, 0.0
    %v323 = vmax.f32 %v317, 0.0
    %v324 = vmax.f32 %v319, 0.0
    %v325 = vpack.c.bf16 %v323, %v321
    %v326 = vpack.c.bf16 %v324, %v322
    %v327 = vld [vmem:[#allocation4] sm:$0xff]
    %v328 = vld [vmem:[#allocation4 + $0x8] sm:$0xff]
    %v329 = vld [vmem:[#allocation4 + $0x10] sm:$0xff]
    %v330 = vld [vmem:[#allocation4 + $0x18] sm:$0xff]
    %v331 = vld [vmem:[#allocation4 + $0x20] sm:$0xff]
    %v332 = vld [vmem:[#allocation4 + $0x28] sm:$0xff]
    %v333 = vld [vmem:[#allocation4 + $0x30] sm:$0xff]
    %v334 = vld [vmem:[#allocation4 + $0x38] sm:$0xff]
    %v335 = vld [vmem:[#allocation4 + $0x40] sm:$0xff]
    %v336 = vld [vmem:[#allocation4 + $0x48] sm:$0xff]
    %v337 = vld [vmem:[#allocation4 + $0x50] sm:$0xff]
    %v338 = vld [vmem:[#allocation4 + $0x58] sm:$0xff]
    %v339 = vld [vmem:[#allocation4 + $0x60] sm:$0xff]
    %v340 = vld [vmem:[#allocation4 + $0x68] sm:$0xff]
    %v341 = vld [vmem:[#allocation4 + $0x70] sm:$0xff]
    %v342 = vld [vmem:[#allocation4 + $0x78] sm:$0xff]
    %v343 = vld [vmem:[#allocation4 + $0x80] sm:$0xff]
    %v344 = vld [vmem:[#allocation4 + $0x88] sm:$0xff]
    %v345 = vld [vmem:[#allocation4 + $0x90] sm:$0xff]
    %v346 = vld [vmem:[#allocation4 + $0x98] sm:$0xff]
    %v347 = vld [vmem:[#allocation4 + $0xa0] sm:$0xff]
    %v348 = vld [vmem:[#allocation4 + $0xa8] sm:$0xff]
    %v349 = vld [vmem:[#allocation4 + $0xb0] sm:$0xff]
    %v350 = vld [vmem:[#allocation4 + $0xb8] sm:$0xff]
    %v351 = vld [vmem:[#allocation4 + $0xc0] sm:$0xff]
    %v352 = vld [vmem:[#allocation4 + $0xc8] sm:$0xff]
    %v353 = vld [vmem:[#allocation4 + $0xd0] sm:$0xff]
    %v354 = vld [vmem:[#allocation4 + $0xd8] sm:$0xff]
    %v355 = vld [vmem:[#allocation4 + $0xe0] sm:$0xff]
    %v356 = vld [vmem:[#allocation4 + $0xe8] sm:$0xff]
    %v357 = vld [vmem:[#allocation4 + $0xf0] sm:$0xff]
    %v358 = vld [vmem:[#allocation4 + $0xf8] sm:$0xff]
    %v359 = vld [vmem:[#allocation4 + $0x100] sm:$0xff]
    %v360 = vld [vmem:[#allocation4 + $0x108] sm:$0xff]
    %v361 = vld [vmem:[#allocation4 + $0x110] sm:$0xff]
    %v362 = vld [vmem:[#allocation4 + $0x118] sm:$0xff]
    %v363 = vld [vmem:[#allocation4 + $0x120] sm:$0xff]
    %v364 = vld [vmem:[#allocation4 + $0x128] sm:$0xff]
    %v365 = vld [vmem:[#allocation4 + $0x130] sm:$0xff]
    %v366 = vld [vmem:[#allocation4 + $0x138] sm:$0xff]
    %v367 = vld [vmem:[#allocation4 + $0x140] sm:$0xff]
    %v368 = vld [vmem:[#allocation4 + $0x148] sm:$0xff]
    %v369 = vld [vmem:[#allocation4 + $0x150] sm:$0xff]
    %v370 = vld [vmem:[#allocation4 + $0x158] sm:$0xff]
    %v371 = vld [vmem:[#allocation4 + $0x160] sm:$0xff]
    %v372 = vld [vmem:[#allocation4 + $0x168] sm:$0xff]
    %v373 = vld [vmem:[#allocation4 + $0x170] sm:$0xff]
    %v374 = vld [vmem:[#allocation4 + $0x178] sm:$0xff]
    %v375 = vld [vmem:[#allocation4 + $0x180] sm:$0xff]
    %v376 = vld [vmem:[#allocation4 + $0x188] sm:$0xff]
    %v377 = vld [vmem:[#allocation4 + $0x190] sm:$0xff]
    %v378 = vld [vmem:[#allocation4 + $0x198] sm:$0xff]
    %v379 = vld [vmem:[#allocation4 + $0x1a0] sm:$0xff]
    %v380 = vld [vmem:[#allocation4 + $0x1a8] sm:$0xff]
    %v381 = vld [vmem:[#allocation4 + $0x1b0] sm:$0xff]
    %v382 = vld [vmem:[#allocation4 + $0x1b8] sm:$0xff]
    %v383 = vld [vmem:[#allocation4 + $0x1c0] sm:$0xff]
    %v384 = vld [vmem:[#allocation4 + $0x1c8] sm:$0xff]
    %v385 = vld [vmem:[#allocation4 + $0x1d0] sm:$0xff]
    %v386 = vld [vmem:[#allocation4 + $0x1d8] sm:$0xff]
    %v387 = vld [vmem:[#allocation4 + $0x1e0] sm:$0xff]
    %v388 = vld [vmem:[#allocation4 + $0x1e8] sm:$0xff]
    %v389 = vld [vmem:[#allocation4 + $0x1f0] sm:$0xff]
    %v390 = vld [vmem:[#allocation4 + $0x1f8] sm:$0xff]
    %v391 = vld [vmem:[%s6] sm:$0xf]
    %v393 = vlaneseq
    %v394 = vshrl.u32 %v393, 7
    %v395 = vsub.s32 0, %v394
    %v396 = vrot.slane %v391, %v395
    %v397 = vlaneseq
    %v398 = vshrl.u32 %v397, 7
    %v399 = vsub.s32 1, %v398
    %v400 = vrot.slane %v391, %v399
    %v401 = vlaneseq
    %v402 = vshrl.u32 %v401, 7
    %v403 = vsub.s32 2, %v402
    %v404 = vrot.slane %v391, %v403
    %v405 = vlaneseq
    %v406 = vshrl.u32 %v405, 7
    %v407 = vsub.s32 3, %v406
    %v408 = vrot.slane %v391, %v407
    %v477 = vunpack.c.l.b16 %v327
    %v478 = vunpack.c.h.b16 %v327
    %v479 = vunpack.c.l.b16 %v328
    %v480 = vunpack.c.h.b16 %v328
    %v481 = vunpack.c.l.b16 %v329
    %v482 = vunpack.c.h.b16 %v329
    %v483 = vunpack.c.l.b16 %v330
    %v484 = vunpack.c.h.b16 %v330
    %v485 = vunpack.c.l.b16 %v331
    %v486 = vunpack.c.h.b16 %v331
    %v487 = vunpack.c.l.b16 %v332
    %v488 = vunpack.c.h.b16 %v332
    %v489 = vunpack.c.l.b16 %v333
    %v490 = vunpack.c.h.b16 %v333
    %v491 = vunpack.c.l.b16 %v334
    %v492 = vunpack.c.h.b16 %v334
    %v493 = vunpack.c.l.b16 %v335
    %v494 = vunpack.c.h.b16 %v335
    %v495 = vunpack.c.l.b16 %v336
    %v496 = vunpack.c.h.b16 %v336
    %v497 = vunpack.c.l.b16 %v337
    %v498 = vunpack.c.h.b16 %v337
    %v499 = vunpack.c.l.b16 %v338
    %v500 = vunpack.c.h.b16 %v338
    %v501 = vunpack.c.l.b16 %v339
    %v502 = vunpack.c.h.b16 %v339
    %v503 = vunpack.c.l.b16 %v340
    %v504 = vunpack.c.h.b16 %v340
    %v505 = vunpack.c.l.b16 %v341
    %v506 = vunpack.c.h.b16 %v341
    %v507 = vunpack.c.l.b16 %v342
    %v508 = vunpack.c.h.b16 %v342
    %v509 = vunpack.c.l.b16 %v343
    %v510 = vunpack.c.h.b16 %v343
    %v511 = vunpack.c.l.b16 %v344
    %v512 = vunpack.c.h.b16 %v344
    %v513 = vunpack.c.l.b16 %v345
    %v514 = vunpack.c.h.b16 %v345
    %v515 = vunpack.c.l.b16 %v346
    %v516 = vunpack.c.h.b16 %v346
    %v517 = vunpack.c.l.b16 %v347
    %v518 = vunpack.c.h.b16 %v347
    %v519 = vunpack.c.l.b16 %v348
    %v520 = vunpack.c.h.b16 %v348
    %v521 = vunpack.c.l.b16 %v349
    %v522 = vunpack.c.h.b16 %v349
    %v523 = vunpack.c.l.b16 %v350
    %v524 = vunpack.c.h.b16 %v350
    %v525 = vunpack.c.l.b16 %v351
    %v526 = vunpack.c.h.b16 %v351
    %v527 = vunpack.c.l.b16 %v352
    %v528 = vunpack.c.h.b16 %v352
    %v529 = vunpack.c.l.b16 %v353
    %v530 = vunpack.c.h.b16 %v353
    %v531 = vunpack.c.l.b16 %v354
    %v532 = vunpack.c.h.b16 %v354
    %v533 = vunpack.c.l.b16 %v355
    %v534 = vunpack.c.h.b16 %v355
    %v535 = vunpack.c.l.b16 %v356
    %v536 = vunpack.c.h.b16 %v356
    %v537 = vunpack.c.l.b16 %v357
    %v538 = vunpack.c.h.b16 %v357
    %v539 = vunpack.c.l.b16 %v358
    %v540 = vunpack.c.h.b16 %v358
    %v541 = vunpack.c.l.b16 %v359
    %v542 = vunpack.c.h.b16 %v359
    %v543 = vunpack.c.l.b16 %v360
    %v544 = vunpack.c.h.b16 %v360
    %v545 = vunpack.c.l.b16 %v361
    %v546 = vunpack.c.h.b16 %v361
    %v547 = vunpack.c.l.b16 %v362
    %v548 = vunpack.c.h.b16 %v362
    %v549 = vunpack.c.l.b16 %v363
    %v550 = vunpack.c.h.b16 %v363
    %v551 = vunpack.c.l.b16 %v364
    %v552 = vunpack.c.h.b16 %v364
    %v553 = vunpack.c.l.b16 %v365
    %v554 = vunpack.c.h.b16 %v365
    %v555 = vunpack.c.l.b16 %v366
    %v556 = vunpack.c.h.b16 %v366
    %v557 = vunpack.c.l.b16 %v367
    %v558 = vunpack.c.h.b16 %v367
    %v559 = vunpack.c.l.b16 %v368
    %v560 = vunpack.c.h.b16 %v368
    %v561 = vunpack.c.l.b16 %v369
    %v562 = vunpack.c.h.b16 %v369
    %v563 = vunpack.c.l.b16 %v370
    %v564 = vunpack.c.h.b16 %v370
    %v565 = vunpack.c.l.b16 %v371
    %v566 = vunpack.c.h.b16 %v371
    %v567 = vunpack.c.l.b16 %v372
    %v568 = vunpack.c.h.b16 %v372
    %v569 = vunpack.c.l.b16 %v373
    %v570 = vunpack.c.h.b16 %v373
    %v571 = vunpack.c.l.b16 %v374
    %v572 = vunpack.c.h.b16 %v374
    %v573 = vunpack.c.l.b16 %v375
    %v574 = vunpack.c.h.b16 %v375
    %v575 = vunpack.c.l.b16 %v376
    %v576 = vunpack.c.h.b16 %v376
    %v577 = vunpack.c.l.b16 %v377
    %v578 = vunpack.c.h.b16 %v377
    %v579 = vunpack.c.l.b16 %v378
    %v580 = vunpack.c.h.b16 %v378
    %v581 = vunpack.c.l.b16 %v379
    %v582 = vunpack.c.h.b16 %v379
    %v583 = vunpack.c.l.b16 %v380
    %v584 = vunpack.c.h.b16 %v380
    %v585 = vunpack.c.l.b16 %v381
    %v586 = vunpack.c.h.b16 %v381
    %v587 = vunpack.c.l.b16 %v382
    %v588 = vunpack.c.h.b16 %v382
    %v589 = vunpack.c.l.b16 %v383
    %v590 = vunpack.c.h.b16 %v383
    %v591 = vunpack.c.l.b16 %v384
    %v592 = vunpack.c.h.b16 %v384
    %v593 = vunpack.c.l.b16 %v385
    %v594 = vunpack.c.h.b16 %v385
    %v595 = vunpack.c.l.b16 %v386
    %v596 = vunpack.c.h.b16 %v386
    %v597 = vunpack.c.l.b16 %v387
    %v598 = vunpack.c.h.b16 %v387
    %v599 = vunpack.c.l.b16 %v388
    %v600 = vunpack.c.h.b16 %v388
    %v601 = vunpack.c.l.b16 %v389
    %v602 = vunpack.c.h.b16 %v389
    %v603 = vunpack.c.l.b16 %v390
    %v604 = vunpack.c.h.b16 %v390
    %v605 = vpack.c.b16 %v481, %v477
    %v606 = vpack.c.b16 %v482, %v478
    %v607 = vpack.c.b16 %v483, %v479
    %v608 = vpack.c.b16 %v484, %v480
    %v609 = vpack.c.b16 %v489, %v485
    %v610 = vpack.c.b16 %v490, %v486
    %v611 = vpack.c.b16 %v491, %v487
    %v612 = vpack.c.b16 %v492, %v488
    %v613 = vpack.c.b16 %v497, %v493
    %v614 = vpack.c.b16 %v498, %v494
    %v615 = vpack.c.b16 %v499, %v495
    %v616 = vpack.c.b16 %v500, %v496
    %v617 = vpack.c.b16 %v505, %v501
    %v618 = vpack.c.b16 %v506, %v502
    %v619 = vpack.c.b16 %v507, %v503
    %v620 = vpack.c.b16 %v508, %v504
    %v621 = vpack.c.b16 %v513, %v509
    %v622 = vpack.c.b16 %v514, %v510
    %v623 = vpack.c.b16 %v515, %v511
    %v624 = vpack.c.b16 %v516, %v512
    %v625 = vpack.c.b16 %v521, %v517
    %v626 = vpack.c.b16 %v522, %v518
    %v627 = vpack.c.b16 %v523, %v519
    %v628 = vpack.c.b16 %v524, %v520
    %v629 = vpack.c.b16 %v529, %v525
    %v630 = vpack.c.b16 %v530, %v526
    %v631 = vpack.c.b16 %v531, %v527
    %v632 = vpack.c.b16 %v532, %v528
    %v633 = vpack.c.b16 %v537, %v533
    %v634 = vpack.c.b16 %v538, %v534
    %v635 = vpack.c.b16 %v539, %v535
    %v636 = vpack.c.b16 %v540, %v536
    %v637 = vpack.c.b16 %v545, %v541
    %v638 = vpack.c.b16 %v546, %v542
    %v639 = vpack.c.b16 %v547, %v543
    %v640 = vpack.c.b16 %v548, %v544
    %v641 = vpack.c.b16 %v553, %v549
    %v642 = vpack.c.b16 %v554, %v550
    %v643 = vpack.c.b16 %v555, %v551
    %v644 = vpack.c.b16 %v556, %v552
    %v645 = vpack.c.b16 %v561, %v557
    %v646 = vpack.c.b16 %v562, %v558
    %v647 = vpack.c.b16 %v563, %v559
    %v648 = vpack.c.b16 %v564, %v560
    %v649 = vpack.c.b16 %v569, %v565
    %v650 = vpack.c.b16 %v570, %v566
    %v651 = vpack.c.b16 %v571, %v567
    %v652 = vpack.c.b16 %v572, %v568
    %v653 = vpack.c.b16 %v577, %v573
    %v654 = vpack.c.b16 %v578, %v574
    %v655 = vpack.c.b16 %v579, %v575
    %v656 = vpack.c.b16 %v580, %v576
    %v657 = vpack.c.b16 %v585, %v581
    %v658 = vpack.c.b16 %v586, %v582
    %v659 = vpack.c.b16 %v587, %v583
    %v660 = vpack.c.b16 %v588, %v584
    %v661 = vpack.c.b16 %v593, %v589
    %v662 = vpack.c.b16 %v594, %v590
    %v663 = vpack.c.b16 %v595, %v591
    %v664 = vpack.c.b16 %v596, %v592
    %v665 = vpack.c.b16 %v601, %v597
    %v666 = vpack.c.b16 %v602, %v598
    %v667 = vpack.c.b16 %v603, %v599
    %v668 = vpack.c.b16 %v604, %v600
    %733 = vmatprep.subr.bf16.mxu0 %v634
    %734 = vmatpush1.bf16.msra.mxu0 %v633
    %735 = vmatprep.subr.bf16.mxu0 %v630
    %736 = vmatpush1.bf16.msra.mxu0 %v629
    %737 = vmatprep.subr.bf16.mxu0 %v626
    %738 = vmatpush1.bf16.msra.mxu0 %v625
    %739 = vmatprep.subr.bf16.mxu0 %v622
    %740 = vmatpush1.bf16.msra.mxu0 %v621
    %741 = vmatprep.subr.bf16.mxu0 %v618
    %742 = vmatpush1.bf16.msra.mxu0 %v617
    %743 = vmatprep.subr.bf16.mxu0 %v614
    %744 = vmatpush1.bf16.msra.mxu0 %v613
    %745 = vmatprep.subr.bf16.mxu0 %v610
    %746 = vmatpush1.bf16.msra.mxu0 %v609
    %747 = vmatprep.subr.bf16.mxu0 %v606
    %748 = vmatpush1.bf16.msra.mxu0 %v605
    %749 = vmatprep.subr.bf16.mxu0 %v666
    %750 = vmatpush2.bf16.msra.mxu0 %v665
    %751 = vmatprep.subr.bf16.mxu0 %v662
    %752 = vmatpush2.bf16.msra.mxu0 %v661
    %753 = vmatprep.subr.bf16.mxu0 %v658
    %754 = vmatpush2.bf16.msra.mxu0 %v657
    %755 = vmatprep.subr.bf16.mxu0 %v654
    %756 = vmatpush2.bf16.msra.mxu0 %v653
    %757 = vmatprep.subr.bf16.mxu0 %v650
    %758 = vmatpush2.bf16.msra.mxu0 %v649
    %759 = vmatprep.subr.bf16.mxu0 %v646
    %760 = vmatpush2.bf16.msra.mxu0 %v645
    %761 = vmatprep.subr.bf16.mxu0 %v642
    %762 = vmatpush2.bf16.msra.mxu0 %v641
    %763 = vmatprep.subr.bf16.mxu0 %v638
    %764 = vmatpush2.bf16.msra.mxu0 %v637
    %765 = vmatprep.mubr.bf16.mxu0 %v326
    %766 = vmatmul.mubr.bf16.gmra.mxu0 %v325
    %v767 = vpop.f32.mrf.mxu0
    %v768 = vadd.f32 %v396, %v767
    %v769 = vpop.f32.mrf.mxu0
    %v770 = vadd.f32 %v400, %v769
    %v771 = vpop.f32.mrf.mxu0
    %v772 = vadd.f32 %v396, %v771
    %v773 = vpop.f32.mrf.mxu0
    %v774 = vadd.f32 %v400, %v773
    %775 = vdwg.mxu0
    %776 = vmatprep.subr.bf16.mxu0 %v636
    %777 = vmatpush1.bf16.msra.mxu0 %v635
    %778 = vmatprep.subr.bf16.mxu0 %v632
    %779 = vmatpush1.bf16.msra.mxu0 %v631
    %780 = vmatprep.subr.bf16.mxu0 %v628
    %781 = vmatpush1.bf16.msra.mxu0 %v627
    %782 = vmatprep.subr.bf16.mxu0 %v624
    %783 = vmatpush1.bf16.msra.mxu0 %v623
    %784 = vmatprep.subr.bf16.mxu0 %v620
    %785 = vmatpush1.bf16.msra.mxu0 %v619
    %786 = vmatprep.subr.bf16.mxu0 %v616
    %787 = vmatpush1.bf16.msra.mxu0 %v615
    %788 = vmatprep.subr.bf16.mxu0 %v612
    %789 = vmatpush1.bf16.msra.mxu0 %v611
    %790 = vmatprep.subr.bf16.mxu0 %v608
    %791 = vmatpush1.bf16.msra.mxu0 %v607
    %792 = vmatprep.subr.bf16.mxu0 %v668
    %793 = vmatpush2.bf16.msra.mxu0 %v667
    %794 = vmatprep.subr.bf16.mxu0 %v664
    %795 = vmatpush2.bf16.msra.mxu0 %v663
    %796 = vmatprep.subr.bf16.mxu0 %v660
    %797 = vmatpush2.bf16.msra.mxu0 %v659
    %798 = vmatprep.subr.bf16.mxu0 %v656
    %799 = vmatpush2.bf16.msra.mxu0 %v655
    %800 = vmatprep.subr.bf16.mxu0 %v652
    %801 = vmatpush2.bf16.msra.mxu0 %v651
    %802 = vmatprep.subr.bf16.mxu0 %v648
    %803 = vmatpush2.bf16.msra.mxu0 %v647
    %804 = vmatprep.subr.bf16.mxu0 %v644
    %805 = vmatpush2.bf16.msra.mxu0 %v643
    %806 = vmatprep.subr.bf16.mxu0 %v640
    %807 = vmatpush2.bf16.msra.mxu0 %v639
    %808 = vmatprep.mubr.bf16.mxu0 %v326
    %809 = vmatmul.mubr.bf16.gmra.mxu0 %v325
    %v810 = vpop.f32.mrf.mxu0
    %v811 = vadd.f32 %v404, %v810
    %v812 = vpop.f32.mrf.mxu0
    %v813 = vadd.f32 %v408, %v812
    %v814 = vpop.f32.mrf.mxu0
    %v815 = vadd.f32 %v404, %v814
    %v816 = vpop.f32.mrf.mxu0
    %v817 = vadd.f32 %v408, %v816
    %818 = vdwg.mxu0
    %v819 = vmax.f32 %v768, 0.0
    %v820 = vmax.f32 %v770, 0.0
    %v821 = vmax.f32 %v811, 0.0
    %v822 = vmax.f32 %v813, 0.0
    %v823 = vmax.f32 %v772, 0.0
    %v824 = vmax.f32 %v774, 0.0
    %v825 = vmax.f32 %v815, 0.0
    %v826 = vmax.f32 %v817, 0.0
    %v827 = vpack.c.bf16 %v823, %v819
    %v828 = vpack.c.bf16 %v824, %v820
    %v829 = vpack.c.bf16 %v825, %v821
    %v830 = vpack.c.bf16 %v826, %v822
    %v831 = vld [vmem:[#allocation6] sm:$0xff]
    %v832 = vld [vmem:[#allocation6 + $0x8] sm:$0xff]
    %v833 = vld [vmem:[#allocation6 + $0x10] sm:$0xff]
    %v834 = vld [vmem:[#allocation6 + $0x18] sm:$0xff]
    %v835 = vld [vmem:[#allocation6 + $0x20] sm:$0xff]
    %v836 = vld [vmem:[#allocation6 + $0x28] sm:$0xff]
    %v837 = vld [vmem:[#allocation6 + $0x30] sm:$0xff]
    %v838 = vld [vmem:[#allocation6 + $0x38] sm:$0xff]
    %v839 = vld [vmem:[#allocation6 + $0x40] sm:$0xff]
    %v840 = vld [vmem:[#allocation6 + $0x48] sm:$0xff]
    %v841 = vld [vmem:[#allocation6 + $0x50] sm:$0xff]
    %v842 = vld [vmem:[#allocation6 + $0x58] sm:$0xff]
    %v843 = vld [vmem:[#allocation6 + $0x60] sm:$0xff]
    %v844 = vld [vmem:[#allocation6 + $0x68] sm:$0xff]
    %v845 = vld [vmem:[#allocation6 + $0x70] sm:$0xff]
    %v846 = vld [vmem:[#allocation6 + $0x78] sm:$0xff]
    %v847 = vld [vmem:[#allocation6 + $0x80] sm:$0xff]
    %v848 = vld [vmem:[#allocation6 + $0x88] sm:$0xff]
    %v849 = vld [vmem:[#allocation6 + $0x90] sm:$0xff]
    %v850 = vld [vmem:[#allocation6 + $0x98] sm:$0xff]
    %v851 = vld [vmem:[#allocation6 + $0xa0] sm:$0xff]
    %v852 = vld [vmem:[#allocation6 + $0xa8] sm:$0xff]
    %v853 = vld [vmem:[#allocation6 + $0xb0] sm:$0xff]
    %v854 = vld [vmem:[#allocation6 + $0xb8] sm:$0xff]
    %v855 = vld [vmem:[#allocation6 + $0xc0] sm:$0xff]
    %v856 = vld [vmem:[#allocation6 + $0xc8] sm:$0xff]
    %v857 = vld [vmem:[#allocation6 + $0xd0] sm:$0xff]
    %v858 = vld [vmem:[#allocation6 + $0xd8] sm:$0xff]
    %v859 = vld [vmem:[#allocation6 + $0xe0] sm:$0xff]
    %v860 = vld [vmem:[#allocation6 + $0xe8] sm:$0xff]
    %v861 = vld [vmem:[#allocation6 + $0xf0] sm:$0xff]
    %v862 = vld [vmem:[#allocation6 + $0xf8] sm:$0xff]
    %v863 = vld [vmem:[#allocation6 + $0x100] sm:$0xff]
    %v864 = vld [vmem:[#allocation6 + $0x108] sm:$0xff]
    %v865 = vld [vmem:[#allocation6 + $0x110] sm:$0xff]
    %v866 = vld [vmem:[#allocation6 + $0x118] sm:$0xff]
    %v867 = vld [vmem:[#allocation6 + $0x120] sm:$0xff]
    %v868 = vld [vmem:[#allocation6 + $0x128] sm:$0xff]
    %v869 = vld [vmem:[#allocation6 + $0x130] sm:$0xff]
    %v870 = vld [vmem:[#allocation6 + $0x138] sm:$0xff]
    %v871 = vld [vmem:[#allocation6 + $0x140] sm:$0xff]
    %v872 = vld [vmem:[#allocation6 + $0x148] sm:$0xff]
    %v873 = vld [vmem:[#allocation6 + $0x150] sm:$0xff]
    %v874 = vld [vmem:[#allocation6 + $0x158] sm:$0xff]
    %v875 = vld [vmem:[#allocation6 + $0x160] sm:$0xff]
    %v876 = vld [vmem:[#allocation6 + $0x168] sm:$0xff]
    %v877 = vld [vmem:[#allocation6 + $0x170] sm:$0xff]
    %v878 = vld [vmem:[#allocation6 + $0x178] sm:$0xff]
    %v879 = vld [vmem:[#allocation6 + $0x180] sm:$0xff]
    %v880 = vld [vmem:[#allocation6 + $0x188] sm:$0xff]
    %v881 = vld [vmem:[#allocation6 + $0x190] sm:$0xff]
    %v882 = vld [vmem:[#allocation6 + $0x198] sm:$0xff]
    %v883 = vld [vmem:[#allocation6 + $0x1a0] sm:$0xff]
    %v884 = vld [vmem:[#allocation6 + $0x1a8] sm:$0xff]
    %v885 = vld [vmem:[#allocation6 + $0x1b0] sm:$0xff]
    %v886 = vld [vmem:[#allocation6 + $0x1b8] sm:$0xff]
    %v887 = vld [vmem:[#allocation6 + $0x1c0] sm:$0xff]
    %v888 = vld [vmem:[#allocation6 + $0x1c8] sm:$0xff]
    %v889 = vld [vmem:[#allocation6 + $0x1d0] sm:$0xff]
    %v890 = vld [vmem:[#allocation6 + $0x1d8] sm:$0xff]
    %v891 = vld [vmem:[#allocation6 + $0x1e0] sm:$0xff]
    %v892 = vld [vmem:[#allocation6 + $0x1e8] sm:$0xff]
    %v893 = vld [vmem:[#allocation6 + $0x1f0] sm:$0xff]
    %v894 = vld [vmem:[#allocation6 + $0x1f8] sm:$0xff]
    %v895 = vld [vmem:[%s8] sm:$0x3]
    %v897 = vlaneseq
    %v898 = vshrl.u32 %v897, 7
    %v899 = vsub.s32 0, %v898
    %v900 = vrot.slane %v895, %v899
    %v901 = vlaneseq
    %v902 = vshrl.u32 %v901, 7
    %v903 = vsub.s32 1, %v902
    %v904 = vrot.slane %v895, %v903
    %v971 = vunpack.c.l.b16 %v831
    %v972 = vunpack.c.h.b16 %v831
    %v973 = vunpack.c.l.b16 %v832
    %v974 = vunpack.c.h.b16 %v832
    %v975 = vunpack.c.l.b16 %v833
    %v976 = vunpack.c.h.b16 %v833
    %v977 = vunpack.c.l.b16 %v834
    %v978 = vunpack.c.h.b16 %v834
    %v979 = vunpack.c.l.b16 %v835
    %v980 = vunpack.c.h.b16 %v835
    %v981 = vunpack.c.l.b16 %v836
    %v982 = vunpack.c.h.b16 %v836
    %v983 = vunpack.c.l.b16 %v837
    %v984 = vunpack.c.h.b16 %v837
    %v985 = vunpack.c.l.b16 %v838
    %v986 = vunpack.c.h.b16 %v838
    %v987 = vunpack.c.l.b16 %v839
    %v988 = vunpack.c.h.b16 %v839
    %v989 = vunpack.c.l.b16 %v840
    %v990 = vunpack.c.h.b16 %v840
    %v991 = vunpack.c.l.b16 %v841
    %v992 = vunpack.c.h.b16 %v841
    %v993 = vunpack.c.l.b16 %v842
    %v994 = vunpack.c.h.b16 %v842
    %v995 = vunpack.c.l.b16 %v843
    %v996 = vunpack.c.h.b16 %v843
    %v997 = vunpack.c.l.b16 %v844
    %v998 = vunpack.c.h.b16 %v844
    %v999 = vunpack.c.l.b16 %v845
    %v1000 = vunpack.c.h.b16 %v845
    %v1001 = vunpack.c.l.b16 %v846
    %v1002 = vunpack.c.h.b16 %v846
    %v1003 = vunpack.c.l.b16 %v847
    %v1004 = vunpack.c.h.b16 %v847
    %v1005 = vunpack.c.l.b16 %v848
    %v1006 = vunpack.c.h.b16 %v848
    %v1007 = vunpack.c.l.b16 %v849
    %v1008 = vunpack.c.h.b16 %v849
    %v1009 = vunpack.c.l.b16 %v850
    %v1010 = vunpack.c.h.b16 %v850
    %v1011 = vunpack.c.l.b16 %v851
    %v1012 = vunpack.c.h.b16 %v851
    %v1013 = vunpack.c.l.b16 %v852
    %v1014 = vunpack.c.h.b16 %v852
    %v1015 = vunpack.c.l.b16 %v853
    %v1016 = vunpack.c.h.b16 %v853
    %v1017 = vunpack.c.l.b16 %v854
    %v1018 = vunpack.c.h.b16 %v854
    %v1019 = vunpack.c.l.b16 %v855
    %v1020 = vunpack.c.h.b16 %v855
    %v1021 = vunpack.c.l.b16 %v856
    %v1022 = vunpack.c.h.b16 %v856
    %v1023 = vunpack.c.l.b16 %v857
    %v1024 = vunpack.c.h.b16 %v857
    %v1025 = vunpack.c.l.b16 %v858
    %v1026 = vunpack.c.h.b16 %v858
    %v1027 = vunpack.c.l.b16 %v859
    %v1028 = vunpack.c.h.b16 %v859
    %v1029 = vunpack.c.l.b16 %v860
    %v1030 = vunpack.c.h.b16 %v860
    %v1031 = vunpack.c.l.b16 %v861
    %v1032 = vunpack.c.h.b16 %v861
    %v1033 = vunpack.c.l.b16 %v862
    %v1034 = vunpack.c.h.b16 %v862
    %v1035 = vunpack.c.l.b16 %v863
    %v1036 = vunpack.c.h.b16 %v863
    %v1037 = vunpack.c.l.b16 %v864
    %v1038 = vunpack.c.h.b16 %v864
    %v1039 = vunpack.c.l.b16 %v865
    %v1040 = vunpack.c.h.b16 %v865
    %v1041 = vunpack.c.l.b16 %v866
    %v1042 = vunpack.c.h.b16 %v866
    %v1043 = vunpack.c.l.b16 %v867
    %v1044 = vunpack.c.h.b16 %v867
    %v1045 = vunpack.c.l.b16 %v868
    %v1046 = vunpack.c.h.b16 %v868
    %v1047 = vunpack.c.l.b16 %v869
    %v1048 = vunpack.c.h.b16 %v869
    %v1049 = vunpack.c.l.b16 %v870
    %v1050 = vunpack.c.h.b16 %v870
    %v1051 = vunpack.c.l.b16 %v871
    %v1052 = vunpack.c.h.b16 %v871
    %v1053 = vunpack.c.l.b16 %v872
    %v1054 = vunpack.c.h.b16 %v872
    %v1055 = vunpack.c.l.b16 %v873
    %v1056 = vunpack.c.h.b16 %v873
    %v1057 = vunpack.c.l.b16 %v874
    %v1058 = vunpack.c.h.b16 %v874
    %v1059 = vunpack.c.l.b16 %v875
    %v1060 = vunpack.c.h.b16 %v875
    %v1061 = vunpack.c.l.b16 %v876
    %v1062 = vunpack.c.h.b16 %v876
    %v1063 = vunpack.c.l.b16 %v877
    %v1064 = vunpack.c.h.b16 %v877
    %v1065 = vunpack.c.l.b16 %v878
    %v1066 = vunpack.c.h.b16 %v878
    %v1067 = vunpack.c.l.b16 %v879
    %v1068 = vunpack.c.h.b16 %v879
    %v1069 = vunpack.c.l.b16 %v880
    %v1070 = vunpack.c.h.b16 %v880
    %v1071 = vunpack.c.l.b16 %v881
    %v1072 = vunpack.c.h.b16 %v881
    %v1073 = vunpack.c.l.b16 %v882
    %v1074 = vunpack.c.h.b16 %v882
    %v1075 = vunpack.c.l.b16 %v883
    %v1076 = vunpack.c.h.b16 %v883
    %v1077 = vunpack.c.l.b16 %v884
    %v1078 = vunpack.c.h.b16 %v884
    %v1079 = vunpack.c.l.b16 %v885
    %v1080 = vunpack.c.h.b16 %v885
    %v1081 = vunpack.c.l.b16 %v886
    %v1082 = vunpack.c.h.b16 %v886
    %v1083 = vunpack.c.l.b16 %v887
    %v1084 = vunpack.c.h.b16 %v887
    %v1085 = vunpack.c.l.b16 %v888
    %v1086 = vunpack.c.h.b16 %v888
    %v1087 = vunpack.c.l.b16 %v889
    %v1088 = vunpack.c.h.b16 %v889
    %v1089 = vunpack.c.l.b16 %v890
    %v1090 = vunpack.c.h.b16 %v890
    %v1091 = vunpack.c.l.b16 %v891
    %v1092 = vunpack.c.h.b16 %v891
    %v1093 = vunpack.c.l.b16 %v892
    %v1094 = vunpack.c.h.b16 %v892
    %v1095 = vunpack.c.l.b16 %v893
    %v1096 = vunpack.c.h.b16 %v893
    %v1097 = vunpack.c.l.b16 %v894
    %v1098 = vunpack.c.h.b16 %v894
    %v1099 = vpack.c.b16 %v973, %v971
    %v1100 = vpack.c.b16 %v974, %v972
    %v1101 = vpack.c.b16 %v977, %v975
    %v1102 = vpack.c.b16 %v978, %v976
    %v1103 = vpack.c.b16 %v981, %v979
    %v1104 = vpack.c.b16 %v982, %v980
    %v1105 = vpack.c.b16 %v985, %v983
    %v1106 = vpack.c.b16 %v986, %v984
    %v1107 = vpack.c.b16 %v989, %v987
    %v1108 = vpack.c.b16 %v990, %v988
    %v1109 = vpack.c.b16 %v993, %v991
    %v1110 = vpack.c.b16 %v994, %v992
    %v1111 = vpack.c.b16 %v997, %v995
    %v1112 = vpack.c.b16 %v998, %v996
    %v1113 = vpack.c.b16 %v1001, %v999
    %v1114 = vpack.c.b16 %v1002, %v1000
    %v1115 = vpack.c.b16 %v1005, %v1003
    %v1116 = vpack.c.b16 %v1006, %v1004
    %v1117 = vpack.c.b16 %v1009, %v1007
    %v1118 = vpack.c.b16 %v1010, %v1008
    %v1119 = vpack.c.b16 %v1013, %v1011
    %v1120 = vpack.c.b16 %v1014, %v1012
    %v1121 = vpack.c.b16 %v1017, %v1015
    %v1122 = vpack.c.b16 %v1018, %v1016
    %v1123 = vpack.c.b16 %v1021, %v1019
    %v1124 = vpack.c.b16 %v1022, %v1020
    %v1125 = vpack.c.b16 %v1025, %v1023
    %v1126 = vpack.c.b16 %v1026, %v1024
    %v1127 = vpack.c.b16 %v1029, %v1027
    %v1128 = vpack.c.b16 %v1030, %v1028
    %v1129 = vpack.c.b16 %v1033, %v1031
    %v1130 = vpack.c.b16 %v1034, %v1032
    %v1131 = vpack.c.b16 %v1037, %v1035
    %v1132 = vpack.c.b16 %v1038, %v1036
    %v1133 = vpack.c.b16 %v1041, %v1039
    %v1134 = vpack.c.b16 %v1042, %v1040
    %v1135 = vpack.c.b16 %v1045, %v1043
    %v1136 = vpack.c.b16 %v1046, %v1044
    %v1137 = vpack.c.b16 %v1049, %v1047
    %v1138 = vpack.c.b16 %v1050, %v1048
    %v1139 = vpack.c.b16 %v1053, %v1051
    %v1140 = vpack.c.b16 %v1054, %v1052
    %v1141 = vpack.c.b16 %v1057, %v1055
    %v1142 = vpack.c.b16 %v1058, %v1056
    %v1143 = vpack.c.b16 %v1061, %v1059
    %v1144 = vpack.c.b16 %v1062, %v1060
    %v1145 = vpack.c.b16 %v1065, %v1063
    %v1146 = vpack.c.b16 %v1066, %v1064
    %v1147 = vpack.c.b16 %v1069, %v1067
    %v1148 = vpack.c.b16 %v1070, %v1068
    %v1149 = vpack.c.b16 %v1073, %v1071
    %v1150 = vpack.c.b16 %v1074, %v1072
    %v1151 = vpack.c.b16 %v1077, %v1075
    %v1152 = vpack.c.b16 %v1078, %v1076
    %v1153 = vpack.c.b16 %v1081, %v1079
    %v1154 = vpack.c.b16 %v1082, %v1080
    %v1155 = vpack.c.b16 %v1085, %v1083
    %v1156 = vpack.c.b16 %v1086, %v1084
    %v1157 = vpack.c.b16 %v1089, %v1087
    %v1158 = vpack.c.b16 %v1090, %v1088
    %v1159 = vpack.c.b16 %v1093, %v1091
    %v1160 = vpack.c.b16 %v1094, %v1092
    %v1161 = vpack.c.b16 %v1097, %v1095
    %v1162 = vpack.c.b16 %v1098, %v1096
    %1227 = vmatprep.subr.bf16.mxu0 %v1114
    %1228 = vmatpush1.bf16.msra.mxu0 %v1113
    %1229 = vmatprep.subr.bf16.mxu0 %v1112
    %1230 = vmatpush1.bf16.msra.mxu0 %v1111
    %1231 = vmatprep.subr.bf16.mxu0 %v1110
    %1232 = vmatpush1.bf16.msra.mxu0 %v1109
    %1233 = vmatprep.subr.bf16.mxu0 %v1108
    %1234 = vmatpush1.bf16.msra.mxu0 %v1107
    %1235 = vmatprep.subr.bf16.mxu0 %v1106
    %1236 = vmatpush1.bf16.msra.mxu0 %v1105
    %1237 = vmatprep.subr.bf16.mxu0 %v1104
    %1238 = vmatpush1.bf16.msra.mxu0 %v1103
    %1239 = vmatprep.subr.bf16.mxu0 %v1102
    %1240 = vmatpush1.bf16.msra.mxu0 %v1101
    %1241 = vmatprep.subr.bf16.mxu0 %v1100
    %1242 = vmatpush1.bf16.msra.mxu0 %v1099
    %1243 = vmatprep.subr.bf16.mxu0 %v1130
    %1244 = vmatpush2.bf16.msra.mxu0 %v1129
    %1245 = vmatprep.subr.bf16.mxu0 %v1128
    %1246 = vmatpush2.bf16.msra.mxu0 %v1127
    %1247 = vmatprep.subr.bf16.mxu0 %v1126
    %1248 = vmatpush2.bf16.msra.mxu0 %v1125
    %1249 = vmatprep.subr.bf16.mxu0 %v1124
    %1250 = vmatpush2.bf16.msra.mxu0 %v1123
    %1251 = vmatprep.subr.bf16.mxu0 %v1122
    %1252 = vmatpush2.bf16.msra.mxu0 %v1121
    %1253 = vmatprep.subr.bf16.mxu0 %v1120
    %1254 = vmatpush2.bf16.msra.mxu0 %v1119
    %1255 = vmatprep.subr.bf16.mxu0 %v1118
    %1256 = vmatpush2.bf16.msra.mxu0 %v1117
    %1257 = vmatprep.subr.bf16.mxu0 %v1116
    %1258 = vmatpush2.bf16.msra.mxu0 %v1115
    %1259 = vmatprep.mubr.bf16.mxu0 %v828
    %1260 = vmatmul.mubr.bf16.gmra.mxu0 %v827
    %v1261 = vpop.f32.mrf.mxu0
    %v1262 = vadd.f32 %v900, %v1261
    %v1263 = vpop.f32.mrf.mxu0
    %v1264 = vadd.f32 %v904, %v1263
    %v1265 = vpop.f32.mrf.mxu0
    %v1266 = vadd.f32 %v900, %v1265
    %v1267 = vpop.f32.mrf.mxu0
    %v1268 = vadd.f32 %v904, %v1267
    %1269 = vdwg.mxu0
    %1270 = vmatprep.subr.bf16.mxu0 %v1146
    %1271 = vmatpush1.bf16.msra.mxu0 %v1145
    %1272 = vmatprep.subr.bf16.mxu0 %v1144
    %1273 = vmatpush1.bf16.msra.mxu0 %v1143
    %1274 = vmatprep.subr.bf16.mxu0 %v1142
    %1275 = vmatpush1.bf16.msra.mxu0 %v1141
    %1276 = vmatprep.subr.bf16.mxu0 %v1140
    %1277 = vmatpush1.bf16.msra.mxu0 %v1139
    %1278 = vmatprep.subr.bf16.mxu0 %v1138
    %1279 = vmatpush1.bf16.msra.mxu0 %v1137
    %1280 = vmatprep.subr.bf16.mxu0 %v1136
    %1281 = vmatpush1.bf16.msra.mxu0 %v1135
    %1282 = vmatprep.subr.bf16.mxu0 %v1134
    %1283 = vmatpush1.bf16.msra.mxu0 %v1133
    %1284 = vmatprep.subr.bf16.mxu0 %v1132
    %1285 = vmatpush1.bf16.msra.mxu0 %v1131
    %1286 = vmatprep.subr.bf16.mxu0 %v1162
    %1287 = vmatpush2.bf16.msra.mxu0 %v1161
    %1288 = vmatprep.subr.bf16.mxu0 %v1160
    %1289 = vmatpush2.bf16.msra.mxu0 %v1159
    %1290 = vmatprep.subr.bf16.mxu0 %v1158
    %1291 = vmatpush2.bf16.msra.mxu0 %v1157
    %1292 = vmatprep.subr.bf16.mxu0 %v1156
    %1293 = vmatpush2.bf16.msra.mxu0 %v1155
    %1294 = vmatprep.subr.bf16.mxu0 %v1154
    %1295 = vmatpush2.bf16.msra.mxu0 %v1153
    %1296 = vmatprep.subr.bf16.mxu0 %v1152
    %1297 = vmatpush2.bf16.msra.mxu0 %v1151
    %1298 = vmatprep.subr.bf16.mxu0 %v1150
    %1299 = vmatpush2.bf16.msra.mxu0 %v1149
    %1300 = vmatprep.subr.bf16.mxu0 %v1148
    %1301 = vmatpush2.bf16.msra.mxu0 %v1147
    %1302 = vmatprep.mubr.bf16.mxu0 %v830
    %1303 = vmatmul.mubr.bf16.gmra.mxu0 %v829
    %v1304 = vpop.f32.mrf.mxu0
    %v1305 = vadd.f32 %v1262, %v1304
    %v1306 = vpop.f32.mrf.mxu0
    %v1307 = vadd.f32 %v1264, %v1306
    %v1308 = vpop.f32.mrf.mxu0
    %v1309 = vadd.f32 %v1266, %v1308
    %v1310 = vpop.f32.mrf.mxu0
    %v1311 = vadd.f32 %v1268, %v1310
    %1312 = vdwg.mxu0
    %v1313 = vmax.f32 %v1305, 0.0
    %v1314 = vmax.f32 %v1307, 0.0
    %v1315 = vmax.f32 %v1309, 0.0
    %v1316 = vmax.f32 %v1311, 0.0
    %v1317 = vpack.c.bf16 %v1315, %v1313
    %v1318 = vpack.c.bf16 %v1316, %v1314
    %v1319 = vld [vmem:[#allocation7] sm:$0xf]
    %v1320 = vld [vmem:[#allocation7 + $0x4] sm:$0xf]
    %v1321 = vld [vmem:[#allocation7 + $0x8] sm:$0xf]
    %v1322 = vld [vmem:[#allocation7 + $0xc] sm:$0xf]
    %v1323 = vld [vmem:[#allocation7 + $0x10] sm:$0xf]
    %v1324 = vld [vmem:[#allocation7 + $0x14] sm:$0xf]
    %v1325 = vld [vmem:[#allocation7 + $0x18] sm:$0xf]
    %v1326 = vld [vmem:[#allocation7 + $0x1c] sm:$0xf]
    %v1327 = vld [vmem:[#allocation7 + $0x20] sm:$0xf]
    %v1328 = vld [vmem:[#allocation7 + $0x24] sm:$0xf]
    %v1329 = vld [vmem:[#allocation7 + $0x28] sm:$0xf]
    %v1330 = vld [vmem:[#allocation7 + $0x2c] sm:$0xf]
    %v1331 = vld [vmem:[#allocation7 + $0x30] sm:$0xf]
    %v1332 = vld [vmem:[#allocation7 + $0x34] sm:$0xf]
    %v1333 = vld [vmem:[#allocation7 + $0x38] sm:$0xf]
    %v1334 = vld [vmem:[#allocation7 + $0x3c] sm:$0xf]
    %v1335 = vld [vmem:[#allocation7 + $0x40] sm:$0xf]
    %v1336 = vld [vmem:[#allocation7 + $0x44] sm:$0xf]
    %v1337 = vld [vmem:[#allocation7 + $0x48] sm:$0xf]
    %v1338 = vld [vmem:[#allocation7 + $0x4c] sm:$0xf]
    %v1339 = vld [vmem:[#allocation7 + $0x50] sm:$0xf]
    %v1340 = vld [vmem:[#allocation7 + $0x54] sm:$0xf]
    %v1341 = vld [vmem:[#allocation7 + $0x58] sm:$0xf]
    %v1342 = vld [vmem:[#allocation7 + $0x5c] sm:$0xf]
    %v1343 = vld [vmem:[#allocation7 + $0x60] sm:$0xf]
    %v1344 = vld [vmem:[#allocation7 + $0x64] sm:$0xf]
    %v1345 = vld [vmem:[#allocation7 + $0x68] sm:$0xf]
    %v1346 = vld [vmem:[#allocation7 + $0x6c] sm:$0xf]
    %v1347 = vld [vmem:[#allocation7 + $0x70] sm:$0xf]
    %v1348 = vld [vmem:[#allocation7 + $0x74] sm:$0xf]
    %v1349 = vld [vmem:[#allocation7 + $0x78] sm:$0xf]
    %v1350 = vld [vmem:[#allocation7 + $0x7c] sm:$0xf]
    %v1351 = vld [vmem:[%s10] sm:$0x1]
    %v1353 = vlaneseq
    %v1354 = vshrl.u32 %v1353, 7
    %v1355 = vsub.s32 0, %v1354
    %v1356 = vrot.slane %v1351, %v1355
    %v1390 = vunpack.c.l.b16 %v1319
    %v1391 = vunpack.c.l.b16 %v1320
    %v1392 = vunpack.c.l.b16 %v1321
    %v1393 = vunpack.c.l.b16 %v1322
    %v1394 = vunpack.c.l.b16 %v1323
    %v1395 = vunpack.c.l.b16 %v1324
    %v1396 = vunpack.c.l.b16 %v1325
    %v1397 = vunpack.c.l.b16 %v1326
    %v1398 = vunpack.c.l.b16 %v1327
    %v1399 = vunpack.c.l.b16 %v1328
    %v1400 = vunpack.c.l.b16 %v1329
    %v1401 = vunpack.c.l.b16 %v1330
    %v1402 = vunpack.c.l.b16 %v1331
    %v1403 = vunpack.c.l.b16 %v1332
    %v1404 = vunpack.c.l.b16 %v1333
    %v1405 = vunpack.c.l.b16 %v1334
    %v1406 = vunpack.c.l.b16 %v1335
    %v1407 = vunpack.c.l.b16 %v1336
    %v1408 = vunpack.c.l.b16 %v1337
    %v1409 = vunpack.c.l.b16 %v1338
    %v1410 = vunpack.c.l.b16 %v1339
    %v1411 = vunpack.c.l.b16 %v1340
    %v1412 = vunpack.c.l.b16 %v1341
    %v1413 = vunpack.c.l.b16 %v1342
    %v1414 = vunpack.c.l.b16 %v1343
    %v1415 = vunpack.c.l.b16 %v1344
    %v1416 = vunpack.c.l.b16 %v1345
    %v1417 = vunpack.c.l.b16 %v1346
    %v1418 = vunpack.c.l.b16 %v1347
    %v1419 = vunpack.c.l.b16 %v1348
    %v1420 = vunpack.c.l.b16 %v1349
    %v1421 = vunpack.c.l.b16 %v1350
    %v1422 = vpack.c.b16 %v1391, %v1390
    %v1423 = vpack.c.b16 %v1393, %v1392
    %v1424 = vpack.c.b16 %v1395, %v1394
    %v1425 = vpack.c.b16 %v1397, %v1396
    %v1426 = vpack.c.b16 %v1399, %v1398
    %v1427 = vpack.c.b16 %v1401, %v1400
    %v1428 = vpack.c.b16 %v1403, %v1402
    %v1429 = vpack.c.b16 %v1405, %v1404
    %v1430 = vpack.c.b16 %v1407, %v1406
    %v1431 = vpack.c.b16 %v1409, %v1408
    %v1432 = vpack.c.b16 %v1411, %v1410
    %v1433 = vpack.c.b16 %v1413, %v1412
    %v1434 = vpack.c.b16 %v1415, %v1414
    %v1435 = vpack.c.b16 %v1417, %v1416
    %v1436 = vpack.c.b16 %v1419, %v1418
    %v1437 = vpack.c.b16 %v1421, %v1420
    %1454 = vmatprep.subr.bf16.mxu0 0
    %1455 = vmatpush1.bf16.msra.mxu0 %v1429
    %1456 = vmatprep.subr.bf16.mxu0 0
    %1457 = vmatpush1.bf16.msra.mxu0 %v1428
    %1458 = vmatprep.subr.bf16.mxu0 0
    %1459 = vmatpush1.bf16.msra.mxu0 %v1427
    %1460 = vmatprep.subr.bf16.mxu0 0
    %1461 = vmatpush1.bf16.msra.mxu0 %v1426
    %1462 = vmatprep.subr.bf16.mxu0 0
    %1463 = vmatpush1.bf16.msra.mxu0 %v1425
    %1464 = vmatprep.subr.bf16.mxu0 0
    %1465 = vmatpush1.bf16.msra.mxu0 %v1424
    %1466 = vmatprep.subr.bf16.mxu0 0
    %1467 = vmatpush1.bf16.msra.mxu0 %v1423
    %1468 = vmatprep.subr.bf16.mxu0 0
    %1469 = vmatpush1.bf16.msra.mxu0 %v1422
    %1470 = vmatprep.subr.bf16.mxu0 0
    %1471 = vmatpush2.bf16.msra.mxu0 %v1437
    %1472 = vmatprep.subr.bf16.mxu0 0
    %1473 = vmatpush2.bf16.msra.mxu0 %v1436
    %1474 = vmatprep.subr.bf16.mxu0 0
    %1475 = vmatpush2.bf16.msra.mxu0 %v1435
    %1476 = vmatprep.subr.bf16.mxu0 0
    %1477 = vmatpush2.bf16.msra.mxu0 %v1434
    %1478 = vmatprep.subr.bf16.mxu0 0
    %1479 = vmatpush2.bf16.msra.mxu0 %v1433
    %1480 = vmatprep.subr.bf16.mxu0 0
    %1481 = vmatpush2.bf16.msra.mxu0 %v1432
    %1482 = vmatprep.subr.bf16.mxu0 0
    %1483 = vmatpush2.bf16.msra.mxu0 %v1431
    %1484 = vmatprep.subr.bf16.mxu0 0
    %1485 = vmatpush2.bf16.msra.mxu0 %v1430
    %1486 = vmatprep.mubr.bf16.mxu0 %v1318
    %1487 = vmatmul.mubr.bf16.gmra.mxu0 %v1317
    %v1488 = vpop.f32.mrf.mxu0
    %v1489 = vadd.f32 %v1356, %v1488
    %v1490 = vpop.f32.mrf.mxu0
    %v1491 = vpop.f32.mrf.mxu0
    %v1492 = vadd.f32 %v1356, %v1491
    %v1493 = vpop.f32.mrf.mxu0
    %1494 = vdwg.mxu0
    %v1495 = vtanh.pop %v1489
    %v1496 = vtanh.pop %v1492
    %v1497 = vpack.c.bf16 %v1496, %v1495
    %v1498 = vld [vmem:[%s11] sm:$0xf]
    %v1499 = vld [vmem:[%s11 + $0x4] sm:$0xf]
    %v1500 = vld [vmem:[%s11 + $0x8] sm:$0xf]
    %v1501 = vld [vmem:[%s11 + $0xc] sm:$0xf]
    %v1502 = vld [vmem:[%s11 + $0x10] sm:$0xf]
    %v1503 = vld [vmem:[%s11 + $0x14] sm:$0xf]
    %v1504 = vld [vmem:[%s11 + $0x18] sm:$0xf]
    %v1505 = vld [vmem:[%s11 + $0x1c] sm:$0xf]
    %v1506 = vld [vmem:[%s11 + $0x20] sm:$0xf]
    %v1507 = vld [vmem:[%s11 + $0x24] sm:$0xf]
    %v1508 = vld [vmem:[%s11 + $0x28] sm:$0xf]
    %v1509 = vld [vmem:[%s11 + $0x2c] sm:$0xf]
    %v1510 = vld [vmem:[%s11 + $0x30] sm:$0xf]
    %v1511 = vld [vmem:[%s11 + $0x34] sm:$0xf]
    %v1512 = vld [vmem:[%s11 + $0x38] sm:$0xf]
    %v1513 = vld [vmem:[%s11 + $0x3c] sm:$0xf]
    %v1514 = vld [vmem:[%s12] sm:$0x1]
    %v1516 = vlaneseq
    %v1517 = vshrl.u32 %v1516, 7
    %v1518 = vsub.s32 0, %v1517
    %v1519 = vrot.slane %v1514, %v1518
    %v1537 = vunpack.c.l.b16 %v1498
    %v1538 = vunpack.c.l.b16 %v1499
    %v1539 = vunpack.c.l.b16 %v1500
    %v1540 = vunpack.c.l.b16 %v1501
    %v1541 = vunpack.c.l.b16 %v1502
    %v1542 = vunpack.c.l.b16 %v1503
    %v1543 = vunpack.c.l.b16 %v1504
    %v1544 = vunpack.c.l.b16 %v1505
    %v1545 = vunpack.c.l.b16 %v1506
    %v1546 = vunpack.c.l.b16 %v1507
    %v1547 = vunpack.c.l.b16 %v1508
    %v1548 = vunpack.c.l.b16 %v1509
    %v1549 = vunpack.c.l.b16 %v1510
    %v1550 = vunpack.c.l.b16 %v1511
    %v1551 = vunpack.c.l.b16 %v1512
    %v1552 = vunpack.c.l.b16 %v1513
    %v1553 = vpack.c.b16 %v1538, %v1537
    %v1554 = vpack.c.b16 %v1540, %v1539
    %v1555 = vpack.c.b16 %v1542, %v1541
    %v1556 = vpack.c.b16 %v1544, %v1543
    %v1557 = vpack.c.b16 %v1546, %v1545
    %v1558 = vpack.c.b16 %v1548, %v1547
    %v1559 = vpack.c.b16 %v1550, %v1549
    %v1560 = vpack.c.b16 %v1552, %v1551
    %1569 = vmatprep.subr.bf16.mxu0 0
    %1570 = vmatpush1.bf16.msra.mxu0 %v1560
    %1571 = vmatprep.subr.bf16.mxu0 0
    %1572 = vmatpush1.bf16.msra.mxu0 %v1559
    %1573 = vmatprep.subr.bf16.mxu0 0
    %1574 = vmatpush1.bf16.msra.mxu0 %v1558
    %1575 = vmatprep.subr.bf16.mxu0 0
    %1576 = vmatpush1.bf16.msra.mxu0 %v1557
    %1577 = vmatprep.subr.bf16.mxu0 0
    %1578 = vmatpush1.bf16.msra.mxu0 %v1556
    %1579 = vmatprep.subr.bf16.mxu0 0
    %1580 = vmatpush1.bf16.msra.mxu0 %v1555
    %1581 = vmatprep.subr.bf16.mxu0 0
    %1582 = vmatpush1.bf16.msra.mxu0 %v1554
    %1583 = vmatprep.subr.bf16.mxu0 0
    %1584 = vmatpush1.bf16.msra.mxu0 %v1553
    %1585 = vmatprep.subr.bf16.mxu0 0
    %1586 = vmatpush2.bf16.msra.mxu0 0
    %1587 = vmatprep.subr.bf16.mxu0 0
    %1588 = vmatpush2.bf16.msra.mxu0 0
    %1589 = vmatprep.subr.bf16.mxu0 0
    %1590 = vmatpush2.bf16.msra.mxu0 0
    %1591 = vmatprep.subr.bf16.mxu0 0
    %1592 = vmatpush2.bf16.msra.mxu0 0
    %1593 = vmatprep.subr.bf16.mxu0 0
    %1594 = vmatpush2.bf16.msra.mxu0 0
    %1595 = vmatprep.subr.bf16.mxu0 0
    %1596 = vmatpush2.bf16.msra.mxu0 0
    %1597 = vmatprep.subr.bf16.mxu0 0
    %1598 = vmatpush2.bf16.msra.mxu0 0
    %1599 = vmatprep.subr.bf16.mxu0 0
    %1600 = vmatpush2.bf16.msra.mxu0 0
    %1601 = vmatprep.mubr.bf16.mxu0 0
    %1602 = vmatmul.mubr.bf16.gmra.mxu0 %v1497
    %v1603 = vpop.f32.mrf.mxu0
    %v1604 = vadd.f32 %v1519, %v1603
    %v1605 = vpop.f32.mrf.mxu0
    %v1606 = vpop.f32.mrf.mxu0
    %v1607 = vadd.f32 %v1519, %v1606
    %v1608 = vpop.f32.mrf.mxu0
    %1609 = vdwg.mxu0
    %v1610 = vtanh.pop %v1604
    %v1611 = vtanh.pop %v1607
    %1612 = vst.msk [vmem:[%s13] sm:$0xff] %vm115, %v1610
    %1613 = vst.msk [vmem:[%s13 + $0x8] sm:$0xff] %vm115, %v1611
    // Predicated region
    $region70: #{_forward_impl.1} parent=1 // pred_check
      _
    $region71: #{_forward_impl.1} parent=1 // pred_check_branch
      %1615 = sbr.rel (0) target = $region73
    $region72: #{_forward_impl.1} parent=1 // pred_region
      _
    $region73: #{_forward_impl.1} parent=1 // pred_fallthru
      _
    // Predicated region
    $region74: #{_forward_impl.1} parent=1 // pred_check
      _
    $region75: #{_forward_impl.1} parent=1 // pred_check_branch
      %1617 = sbr.rel (0) target = $region77
    $region76: #{_forward_impl.1} parent=1 // pred_region
      _
    $region77: #{_forward_impl.1} parent=1 // pred_fallthru
      _
    %1618 = vsyncpa [#allocation3], 1
    %1619 = vsyncpa [#allocation5], 1
    %1620 = vsyncpa [#allocation8], 1

</llo_original>
